<compile_context>
chip_gen: v7x
topology: tpu7x:2x2x1
jax: 0.10.0
libtpu: 0.0.40
codegen_flags: <defaults>
</compile_context>

<pallas_src>
import functools
import math

import numpy as np
import jax
import jax.numpy as jnp
from jax import lax
from jax.experimental import pallas as pl
from jax.experimental.pallas import tpu as pltpu


def _mm(a, b):
    return jnp.dot(a, b, preferred_element_type=jnp.float32)


def _atan2(y, x):
    """Cephes-style atan2 on the VPU (|err| ~ 1e-6 rad); torch.angle equivalent."""
    ax = jnp.abs(x)
    ay = jnp.abs(y)
    hi = jnp.maximum(ax, ay)
    lo = jnp.minimum(ax, ay)
    t = lo / jnp.where(hi > 0.0, hi, 1.0)                 # in [0, 1]
    red = t > 0.4142135623730951                          # tan(pi/8) range reduction
    tr = jnp.where(red, (t - 1.0) / (t + 1.0), t)         # |tr| <= tan(pi/8)
    z = tr * tr
    p = ((((8.05374449538e-2 * z - 1.38776856032e-1) * z + 1.99777106478e-1) * z
          - 3.33329491539e-1) * z * tr + tr)
    r = jnp.where(red, 0.25 * math.pi + p, p)
    r = jnp.where(ay > ax, 0.5 * math.pi - r, r)
    r = jnp.where(x < 0.0, math.pi - r, r)
    return jnp.where(y < 0.0, -r, r)


# ---------------------------------------------------------------------------
# Fused Pallas kernel (the entire FinalAdjust forward)
# ---------------------------------------------------------------------------
def _final_adjust_kernel(data_ref, mask_ref, wsq_ref, w3_ref, wfuse_ref, bias_ref,
                         idft_ref, out_ref, tap_ref, *, C, Co, W, L, Lout):
    xr = data_ref[0 * C:1 * C, :]                         # Re(x)
    xi = data_ref[1 * C:2 * C, :]                         # Im(x)
    ya = data_ref[2 * C:3 * C, :]                         # y_amp
    yp = data_ref[3 * C:4 * C, :]                         # y_phase

    wsq = wsq_ref[...]
    b = bias_ref[...]

    mag = jnp.sqrt(xr * xr + xi * xi)                     # torch.abs(x)
    pha = _atan2(xi, xr)                                  # torch.angle(x), in-kernel
    mag = _mm(wsq[0:C], mag) + b[0:C]                     # processmag (1x1)
    pha = _mm(wsq[C:2 * C], pha) + b[C:2 * C]             # processpha (1x1)

    # SFT 3x3 convs: convmul & convadd share input y_amp, so each of the 9 taps is
    # generated ONCE (XLU roll + 0/1 boundary mask), stacked into a (9C, L) VMEM
    # scratch, and hit with one fused (2C, 9C) matmul (depth-72 contraction).
    t = 0
    for dy in (-1, 0, 1):
        for dx in (-1, 0, 1):
            s = dy * W + dx
            if s == 0:
                tap_ref[t * C:(t + 1) * C, :] = ya        # centre tap: no shift/mask
            else:
                tap_ref[t * C:(t + 1) * C, :] = (
                    pltpu.roll(ya, (-s) % L, axis=1) * mask_ref[t])
            t += 1
    acc = _mm(w3_ref[...], tap_ref[...]) + b[2 * C:4 * C]
    mul = acc[:C]
    add = acc[C:]

    # SFT.convfuse(cat([mag, mul*mag + add])) and cat(cat([y_phase, pha])):
    # pre-split weight halves -> two accumulating matmuls, no sublane-concat copy.
    mag = (_mm(wsq[2 * C:3 * C], mag) + _mm(wsq[3 * C:4 * C], mul * mag + add)
           + b[4 * C:5 * C])
    pha = _mm(wsq[4 * C:5 * C], yp) + _mm(wsq[5 * C:6 * C], pha) + b[5 * C:6 * C]

    fr = mag * jnp.cos(pha)                               # Re(x_freq)
    fi = mag * jnp.sin(pha)                               # Im(x_freq)

    # torch.fft.irfft2 as one lane-dense MXU matmul against the precomputed
    # per-sample block-diagonal real-IDFT matrix (full 2L contraction depth).
    # (On v6e/v7x this operand pair may be cast to bf16; kept f32 to preserve the
    #  self-test error budget.)
    x_sp = _mm(jnp.concatenate([fr, fi], axis=1), idft_ref[...])

    # fuse = Conv1x1(2C -> Co) over channel-concat [x_freq_spatial, x_freq]; the real
    # weights are applied linearly to the complex x_freq (bias -> real part).
    wfuse = wfuse_ref[...]
    out_ref[:, :Lout] = (_mm(wfuse[:, :C], x_sp) + _mm(wfuse[:, C:], fr)
                         + b[6 * C:6 * C + Co])
    out_ref[:, Lout:] = _mm(wfuse[:, C:], fi)


# ---------------------------------------------------------------------------
# Wrapper: constant building + layout plumbing
# ---------------------------------------------------------------------------
def _tap_masks(N, H, W):
    """mask[t, 0, n*H*W + h*W + w] = 1 iff (h+dy, w+dx) in bounds, t = (dy+1)*3 + (dx+1)."""
    P = H * W
    m = np.zeros((9, 1, N * P), np.float32)
    t = 0
    for dy in (-1, 0, 1):
        for dx in (-1, 0, 1):
            for h in range(H):
                for w in range(W):
                    if 0 <= h + dy < H and 0 <= w + dx < W:
                        m[t, 0, h * W + w::P] = 1.0       # same mask for every sample
            t += 1
    return jnp.asarray(m)


def _idft_matrix(N, H, Wf):
    """Real (2L, Lout) matrix M with [Re(X) | Im(X)] @ M == irfft2(X) per (n, c)."""
    P = H * Wf
    basis = np.eye(P, dtype=np.complex64).reshape(P, H, Wf)
    br = np.fft.irfft2(basis, axes=(-2, -1)).astype(np.float32)        # (P, H, Wout)
    bi = np.fft.irfft2(1j * basis, axes=(-2, -1)).astype(np.float32)
    wout = br.shape[-1]
    eye_n = np.eye(N, dtype=np.float32)
    mr = np.kron(eye_n, br.reshape(P, H * wout))                       # block-diag over N
    mi = np.kron(eye_n, bi.reshape(P, H * wout))
    return jnp.asarray(np.concatenate([mr, mi], axis=0)), wout         # (2L, Lout)


def _pack_weights(p, C, Co):
    w1 = lambda w: w[:, :, 0, 0].astype(jnp.float32)
    wsft = w1(p["w_sftfuse"])
    wcat = w1(p["w_cat"])
    wsq = jnp.concatenate([w1(p["w_mag"]), w1(p["w_pha"]),
                           wsft[:, :C], wsft[:, C:],
                           wcat[:, :C], wcat[:, C:]], axis=0)           # (6C, C)

    def w3tap(w):  # (C,C,3,3) -> (C, 9C): column t*C+i = weight of tap t, in-chan i
        w9 = jnp.transpose(w, (2, 3, 0, 1)).reshape(9, C, C)            # [t, o, i]
        return jnp.transpose(w9, (1, 0, 2)).reshape(C, 9 * C)           # [o, t*C+i]

    w3 = jnp.concatenate([w3tap(p["w_mul"]), w3tap(p["w_add"])], axis=0)  # (2C, 9C)
    wfuse = w1(p["w_fuse"])                                               # (Co, 2C)
    bias = jnp.concatenate([p["b_mag"], p["b_pha"], p["b_mul"], p["b_add"],
                            p["b_sftfuse"], p["b_cat"], p["b_fuse"]]
                           ).astype(jnp.float32).reshape(-1, 1)           # (6C+Co, 1)
    return wsq, w3, wfuse, bias


def _full_spec(a):
    nd = a.ndim
    return pl.BlockSpec(a.shape, lambda i: (0,) * nd)


def final_adjust(x, y_amp, y_phase, p):
    """FinalAdjust.forward -> complex (N, Co, H, W_out)."""
    N, C, H, Wf = y_amp.shape
    Co = p["w_fuse"].shape[0]
    L = N * H * Wf

    idft, Wout = _idft_matrix(N, H, Wf)
    # TODO(synk): the reference `fuse(torch.cat([x_freq_spatial, x_freq]))` is not
    # executable in PyTorch (dim-0 cat of a real and a complex tensor feeding a real
    # Conv2d expecting 2*in_chans channels). We implement the shape-consistent intent:
    # channel-concat with the real 1x1 weights applied linearly to the complex tensor
    # (bias -> real part), which requires irfft2's output width == frequency width.
    assert Wout == Wf, "final fuse interpretation needs W_freq == 2"
    Lout = N * H * Wout

    # Pack the four NCHW inputs into one (4C, N*H*W) lane-layout slab with a single
    # transpose: channels on sublanes, batch folded into the lane index.
    data = jnp.concatenate([jnp.real(x), jnp.imag(x), y_amp, y_phase], axis=1)
    data = jnp.transpose(data.astype(jnp.float32), (1, 0, 2, 3)).reshape(4 * C, L)

    wsq, w3, wfuse, bias = _pack_weights(p, C, Co)
    args = (data, _tap_masks(N, H, Wf), wsq, w3, wfuse, bias, idft)

    # NOTE: grid=(1,) keeps the whole problem in one lane-dense block at this size.
    # For large N*H*W, add a sample-aligned lane-tile grid axis (tile = multiple of
    # H*W and of 128) marked "parallel" so v7x's second TensorCore is used, and size
    # the tile against v7x's 64 MiB VMEM.
    out = pl.pallas_call(
        functools.partial(_final_adjust_kernel, C=C, Co=Co, W=Wf, L=L, Lout=Lout),
        grid=(1,),
        in_specs=[_full_spec(a) for a in args],
        out_specs=pl.BlockSpec((Co, 2 * Lout), lambda i: (0, 0)),
        out_shape=jax.ShapeDtypeStruct((Co, 2 * Lout), jnp.float32),
        scratch_shapes=[pltpu.VMEM((9 * C, L), jnp.float32)],
        compiler_params=pltpu.CompilerParams(
            dimension_semantics=("arbitrary",),
            vmem_limit_bytes=32 * 1024 * 1024),
    )(*args)

    out = out.reshape(Co, 2, N, H, Wout)        # lanes = part*Lout + n*H*Wout + h*Wout + w
    out = jnp.transpose(out, (1, 2, 0, 3, 4))   # (2, N, Co, H, Wout)
    return lax.complex(out[0], out[1])


# ---------------------------------------------------------------------------
# Pure-JAX reference (same interpretation) and deterministic parameters
# ---------------------------------------------------------------------------
def _conv2d_ref(x, w, b, pad):
    out = lax.conv_general_dilated(
        x, w, window_strides=(1, 1), padding=[(pad, pad), (pad, pad)],
        dimension_numbers=("NCHW", "OIHW", "NCHW"))
    return out + b[None, :, None, None]


def final_adjust_ref(x, y_amp, y_phase, p):
    mag = jnp.abs(x)
    pha = jnp.angle(x)
    mag = _conv2d_ref(mag, p["w_mag"], p["b_mag"], 0)
    pha = _conv2d_ref(pha, p["w_pha"], p["b_pha"], 0)
    mul = _conv2d_ref(y_amp, p["w_mul"], p["b_mul"], 1)
    add = _conv2d_ref(y_amp, p["w_add"], p["b_add"], 1)
    mag = _conv2d_ref(jnp.concatenate([mag, mul * mag + add], axis=1),
                      p["w_sftfuse"], p["b_sftfuse"], 0)
    pha = _conv2d_ref(jnp.concatenate([y_phase, pha], axis=1), p["w_cat"], p["b_cat"], 0)
    x_freq = lax.complex(mag * jnp.cos(pha), mag * jnp.sin(pha))
    x_sp = jnp.fft.irfft2(x_freq, axes=(-2, -1))
    out_r = _conv2d_ref(jnp.concatenate([x_sp, jnp.real(x_freq)], axis=1),
                        p["w_fuse"], p["b_fuse"], 0)
    out_i = _conv2d_ref(jnp.concatenate([jnp.zeros_like(x_sp), jnp.imag(x_freq)], axis=1),
                        p["w_fuse"], jnp.zeros_like(p["b_fuse"]), 0)
    return lax.complex(out_r, out_i)


def make_params(key, c_in, c_out):
    ks = jax.random.split(key, 14)

    def wconv(k, co, ci, kh, kw):
        return jax.random.normal(k, (co, ci, kh, kw), jnp.float32) / np.sqrt(ci * kh * kw)

    def bconv(k, co):
        return 0.1 * jax.random.normal(k, (co,), jnp.float32)

    return {
        "w_mag": wconv(ks[0], c_in, c_in, 1, 1), "b_mag": bconv(ks[1], c_in),
        "w_pha": wconv(ks[2], c_in, c_in, 1, 1), "b_pha": bconv(ks[3], c_in),
        "w_mul": wconv(ks[4], c_in, c_in, 3, 3), "b_mul": bconv(ks[5], c_in),
        "w_add": wconv(ks[6], c_in, c_in, 3, 3), "b_add": bconv(ks[7], c_in),
        "w_sftfuse": wconv(ks[8], c_in, 2 * c_in, 1, 1), "b_sftfuse": bconv(ks[9], c_in),
        "w_cat": wconv(ks[10], c_in, 2 * c_in, 1, 1), "b_cat": bconv(ks[11], c_in),
        "w_fuse": wconv(ks[12], c_out, 2 * c_in, 1, 1), "b_fuse": bconv(ks[13], c_out),
    }


if __name__ == "__main__":
    # W_FREQ = 2 so that irfft2's spatial width equals the frequency width (see note).
    # N * H * W_FREQ = 128 -> one full lane-dense vreg row per channel, unmasked stores.
    N, C_IN, C_OUT, H, W_FREQ = 4, 8, 8, 16, 2
    key = jax.random.PRNGKey(0)
    k_xr, k_xi, k_amp, k_pha, k_par = jax.random.split(key, 5)

    x = lax.complex(jax.random.normal(k_xr, (N, C_IN, H, W_FREQ), jnp.float32),
                    jax.random.normal(k_xi, (N, C_IN, H, W_FREQ), jnp.float32))
    y_amp = jax.random.normal(k_amp, (N, C_IN, H, W_FREQ), jnp.float32)
    y_phase = jax.random.normal(k_pha, (N, C_IN, H, W_FREQ), jnp.float32)
    params = make_params(k_par, C_IN, C_OUT)

    out = jax.block_until_ready(jax.jit(final_adjust)(x, y_amp, y_phase, params))
    ref = jax.block_until_ready(final_adjust_ref(x, y_amp, y_phase, params))

    assert out.shape == ref.shape == (N, C_OUT, H, W_FREQ)
    assert out.dtype == ref.dtype
    err = float(jnp.max(jnp.abs(out - ref)))
    assert err < 3e-2, f"max |pallas - ref| too large: {err}"
    print("KERNEL_OK")
</pallas_src>

<mosaic_0001>
module attributes {stable_mosaic.version = 11 : i64} {
  func.func @_final_adjust_kernel(%arg0: i32, %arg1: memref<32x128xf32, #tpu.memory_space<vmem>>, %arg2: memref<9x1x128xf32, #tpu.memory_space<vmem>>, %arg3: memref<48x8xf32, #tpu.memory_space<vmem>>, %arg4: memref<16x72xf32, #tpu.memory_space<vmem>>, %arg5: memref<8x16xf32, #tpu.memory_space<vmem>>, %arg6: memref<56x1xf32, #tpu.memory_space<vmem>>, %arg7: memref<256x128xf32, #tpu.memory_space<vmem>>, %arg8: memref<8x256xf32, #tpu.memory_space<vmem>>, %arg9: memref<72x128xf32, #tpu.memory_space<vmem>>) attributes {dimension_semantics = [#tpu.dimension_semantics<arbitrary>], iteration_bounds = array<i64: 1>, scalar_prefetch = 0 : i64, scratch_operands = 1 : i64, tpu.core_type = #tpu.core_type<tc>, window_params = [{pipeline_mode = #tpu.pipeline_mode<synchronous>, transform_indices = @transform_0, window_bounds = array<i64: 32, 128>}, {pipeline_mode = #tpu.pipeline_mode<synchronous>, transform_indices = @transform_1, window_bounds = array<i64: 9, 1, 128>}, {pipeline_mode = #tpu.pipeline_mode<synchronous>, transform_indices = @transform_2, window_bounds = array<i64: 48, 8>}, {pipeline_mode = #tpu.pipeline_mode<synchronous>, transform_indices = @transform_3, window_bounds = array<i64: 16, 72>}, {pipeline_mode = #tpu.pipeline_mode<synchronous>, transform_indices = @transform_4, window_bounds = array<i64: 8, 16>}, {pipeline_mode = #tpu.pipeline_mode<synchronous>, transform_indices = @transform_5, window_bounds = array<i64: 56, 1>}, {pipeline_mode = #tpu.pipeline_mode<synchronous>, transform_indices = @transform_6, window_bounds = array<i64: 256, 128>}, {pipeline_mode = #tpu.pipeline_mode<synchronous>, transform_indices = @transform_7, window_bounds = array<i64: 8, 256>}]} {
    %c0 = arith.constant 0 : index
    %c0_0 = arith.constant 0 : index
    %0 = vector.load %arg1[%c0, %c0_0] : memref<32x128xf32, #tpu.memory_space<vmem>>, vector<8x128xf32>
    %c8 = arith.constant 8 : index
    %c0_1 = arith.constant 0 : index
    %1 = vector.load %arg1[%c8, %c0_1] : memref<32x128xf32, #tpu.memory_space<vmem>>, vector<8x128xf32>
    %c16 = arith.constant 16 : index
    %c0_2 = arith.constant 0 : index
    %2 = vector.load %arg1[%c16, %c0_2] : memref<32x128xf32, #tpu.memory_space<vmem>>, vector<8x128xf32>
    %c24 = arith.constant 24 : index
    %c0_3 = arith.constant 0 : index
    %3 = vector.load %arg1[%c24, %c0_3] : memref<32x128xf32, #tpu.memory_space<vmem>>, vector<8x128xf32>
    %c0_4 = arith.constant 0 : index
    %c0_5 = arith.constant 0 : index
    %4 = vector.load %arg3[%c0_4, %c0_5] : memref<48x8xf32, #tpu.memory_space<vmem>>, vector<48x8xf32>
    %c0_6 = arith.constant 0 : index
    %c0_7 = arith.constant 0 : index
    %5 = vector.load %arg6[%c0_6, %c0_7] : memref<56x1xf32, #tpu.memory_space<vmem>>, vector<56x1xf32>
    %6 = arith.mulf %0, %0 : vector<8x128xf32>
    %7 = arith.mulf %1, %1 : vector<8x128xf32>
    %8 = arith.addf %6, %7 : vector<8x128xf32>
    %9 = math.sqrt %8 : vector<8x128xf32>
    %10 = math.absf %0 : vector<8x128xf32>
    %11 = math.absf %1 : vector<8x128xf32>
    %12 = arith.maximumf %10, %11 : vector<8x128xf32>
    %13 = arith.minimumf %10, %11 : vector<8x128xf32>
    %cst = arith.constant 0.000000e+00 : f32
    %14 = vector.broadcast %cst : f32 to vector<8x128xf32>
    %15 = arith.cmpf ogt, %12, %14 : vector<8x128xf32>
    %cst_8 = arith.constant 1.000000e+00 : f32
    %16 = vector.broadcast %cst_8 : f32 to vector<8x128xf32>
    %17 = arith.select %15, %12, %16 : vector<8x128xi1>, vector<8x128xf32>
    %18 = arith.divf %13, %17 : vector<8x128xf32>
    %cst_9 = arith.constant 0.414213568 : f32
    %19 = vector.broadcast %cst_9 : f32 to vector<8x128xf32>
    %20 = arith.cmpf ogt, %18, %19 : vector<8x128xf32>
    %cst_10 = arith.constant 1.000000e+00 : f32
    %21 = vector.broadcast %cst_10 : f32 to vector<8x128xf32>
    %22 = arith.subf %18, %21 : vector<8x128xf32>
    %cst_11 = arith.constant 1.000000e+00 : f32
    %23 = vector.broadcast %cst_11 : f32 to vector<8x128xf32>
    %24 = arith.addf %18, %23 : vector<8x128xf32>
    %25 = arith.divf %22, %24 : vector<8x128xf32>
    %26 = arith.select %20, %25, %18 : vector<8x128xi1>, vector<8x128xf32>
    %27 = arith.mulf %26, %26 : vector<8x128xf32>
    %cst_12 = arith.constant 0.0805374458 : f32
    %28 = vector.broadcast %cst_12 : f32 to vector<8x128xf32>
    %29 = arith.mulf %28, %27 : vector<8x128xf32>
    %cst_13 = arith.constant 0.138776854 : f32
    %30 = vector.broadcast %cst_13 : f32 to vector<8x128xf32>
    %31 = arith.subf %29, %30 : vector<8x128xf32>
    %32 = arith.mulf %31, %27 : vector<8x128xf32>
    %cst_14 = arith.constant 0.199777111 : f32
    %33 = vector.broadcast %cst_14 : f32 to vector<8x128xf32>
    %34 = arith.addf %32, %33 : vector<8x128xf32>
    %35 = arith.mulf %34, %27 : vector<8x128xf32>
    %cst_15 = arith.constant 0.333329499 : f32
    %36 = vector.broadcast %cst_15 : f32 to vector<8x128xf32>
    %37 = arith.subf %35, %36 : vector<8x128xf32>
    %38 = arith.mulf %37, %27 : vector<8x128xf32>
    %39 = arith.mulf %38, %26 : vector<8x128xf32>
    %40 = arith.addf %39, %26 : vector<8x128xf32>
    %cst_16 = arith.constant 0.785398185 : f32
    %41 = vector.broadcast %cst_16 : f32 to vector<8x128xf32>
    %42 = arith.addf %41, %40 : vector<8x128xf32>
    %43 = arith.select %20, %42, %40 : vector<8x128xi1>, vector<8x128xf32>
    %44 = arith.cmpf ogt, %11, %10 : vector<8x128xf32>
    %cst_17 = arith.constant 1.57079637 : f32
    %45 = vector.broadcast %cst_17 : f32 to vector<8x128xf32>
    %46 = arith.subf %45, %43 : vector<8x128xf32>
    %47 = arith.select %44, %46, %43 : vector<8x128xi1>, vector<8x128xf32>
    %cst_18 = arith.constant 0.000000e+00 : f32
    %48 = vector.broadcast %cst_18 : f32 to vector<8x128xf32>
    %49 = arith.cmpf olt, %0, %48 : vector<8x128xf32>
    %cst_19 = arith.constant 3.14159274 : f32
    %50 = vector.broadcast %cst_19 : f32 to vector<8x128xf32>
    %51 = arith.subf %50, %47 : vector<8x128xf32>
    %52 = arith.select %49, %51, %47 : vector<8x128xi1>, vector<8x128xf32>
    %cst_20 = arith.constant 0.000000e+00 : f32
    %53 = vector.broadcast %cst_20 : f32 to vector<8x128xf32>
    %54 = arith.cmpf olt, %1, %53 : vector<8x128xf32>
    %cst_21 = arith.constant 0.000000e+00 : f32
    %55 = vector.broadcast %cst_21 : f32 to vector<8x128xf32>
    %56 = arith.subf %55, %52 : vector<8x128xf32>
    %57 = arith.select %54, %56, %52 : vector<8x128xi1>, vector<8x128xf32>
    %58 = vector.extract_strided_slice %4 {offsets = [0, 0], sizes = [8, 8], strides = [1, 1]} : vector<48x8xf32> to vector<8x8xf32>
    %cst_22 = arith.constant dense<0.000000e+00> : vector<8x128xf32>
    %59 = tpu.matmul %58, %9, %cst_22 {dimension_numbers = #tpu.dot_dimension_numbers<[1], [0], [0], [1], [0, 0, 1, 1], [], []>} : vector<8x8xf32>, vector<8x128xf32>, vector<8x128xf32> -> vector<8x128xf32>
    %60 = vector.extract_strided_slice %5 {offsets = [0, 0], sizes = [8, 1], strides = [1, 1]} : vector<56x1xf32> to vector<8x1xf32>
    %61 = vector.broadcast %60 : vector<8x1xf32> to vector<8x128xf32>
    %62 = arith.addf %59, %61 : vector<8x128xf32>
    %63 = vector.extract_strided_slice %4 {offsets = [8, 0], sizes = [8, 8], strides = [1, 1]} : vector<48x8xf32> to vector<8x8xf32>
    %cst_23 = arith.constant dense<0.000000e+00> : vector<8x128xf32>
    %64 = tpu.matmul %63, %57, %cst_23 {dimension_numbers = #tpu.dot_dimension_numbers<[1], [0], [0], [1], [0, 0, 1, 1], [], []>} : vector<8x8xf32>, vector<8x128xf32>, vector<8x128xf32> -> vector<8x128xf32>
    %65 = vector.extract_strided_slice %5 {offsets = [8, 0], sizes = [8, 1], strides = [1, 1]} : vector<56x1xf32> to vector<8x1xf32>
    %66 = vector.broadcast %65 : vector<8x1xf32> to vector<8x128xf32>
    %67 = arith.addf %64, %66 : vector<8x128xf32>
    %c3_i32 = arith.constant 3 : i32
    %68 = tpu.dynamic_rotate %2 by %c3_i32 dim 1 : vector<8x128xf32>, i32 -> vector<8x128xf32>
    %c0_24 = arith.constant 0 : index
    %c0_25 = arith.constant 0 : index
    %c0_26 = arith.constant 0 : index
    %69 = vector.load %arg2[%c0_24, %c0_25, %c0_26] : memref<9x1x128xf32, #tpu.memory_space<vmem>>, vector<1x1x128xf32>
    %70 = vector.shape_cast %69 : vector<1x1x128xf32> to vector<1x128xf32>
    %71 = vector.broadcast %70 : vector<1x128xf32> to vector<8x128xf32>
    %72 = arith.mulf %68, %71 : vector<8x128xf32>
    %c0_27 = arith.constant 0 : index
    %c0_28 = arith.constant 0 : index
    %73 = vector.load %arg9[%c0_27, %c0_28] : memref<72x128xf32, #tpu.memory_space<vmem>>, vector<8x128xf32>
    tpu.vector_store %arg9[%c0_27, %c0_28], %72 {strides = array<i32>} : memref<72x128xf32, #tpu.memory_space<vmem>>, vector<8x128xf32>,
    %c2_i32 = arith.constant 2 : i32
    %74 = tpu.dynamic_rotate %2 by %c2_i32 dim 1 : vector<8x128xf32>, i32 -> vector<8x128xf32>
    %c1 = arith.constant 1 : index
    %c0_29 = arith.constant 0 : index
    %c0_30 = arith.constant 0 : index
    %75 = vector.load %arg2[%c1, %c0_29, %c0_30] : memref<9x1x128xf32, #tpu.memory_space<vmem>>, vector<1x1x128xf32>
    %76 = vector.shape_cast %75 : vector<1x1x128xf32> to vector<1x128xf32>
    %77 = vector.broadcast %76 : vector<1x128xf32> to vector<8x128xf32>
    %78 = arith.mulf %74, %77 : vector<8x128xf32>
    %c8_31 = arith.constant 8 : index
    %c0_32 = arith.constant 0 : index
    %79 = vector.load %arg9[%c8_31, %c0_32] : memref<72x128xf32, #tpu.memory_space<vmem>>, vector<8x128xf32>
    tpu.vector_store %arg9[%c8_31, %c0_32], %78 {strides = array<i32>} : memref<72x128xf32, #tpu.memory_space<vmem>>, vector<8x128xf32>,
    %c1_i32 = arith.constant 1 : i32
    %80 = tpu.dynamic_rotate %2 by %c1_i32 dim 1 : vector<8x128xf32>, i32 -> vector<8x128xf32>
    %c2 = arith.constant 2 : index
    %c0_33 = arith.constant 0 : index
    %c0_34 = arith.constant 0 : index
    %81 = vector.load %arg2[%c2, %c0_33, %c0_34] : memref<9x1x128xf32, #tpu.memory_space<vmem>>, vector<1x1x128xf32>
    %82 = vector.shape_cast %81 : vector<1x1x128xf32> to vector<1x128xf32>
    %83 = vector.broadcast %82 : vector<1x128xf32> to vector<8x128xf32>
    %84 = arith.mulf %80, %83 : vector<8x128xf32>
    %c16_35 = arith.constant 16 : index
    %c0_36 = arith.constant 0 : index
    %85 = vector.load %arg9[%c16_35, %c0_36] : memref<72x128xf32, #tpu.memory_space<vmem>>, vector<8x128xf32>
    tpu.vector_store %arg9[%c16_35, %c0_36], %84 {strides = array<i32>} : memref<72x128xf32, #tpu.memory_space<vmem>>, vector<8x128xf32>,
    %c1_i32_37 = arith.constant 1 : i32
    %86 = tpu.dynamic_rotate %2 by %c1_i32_37 dim 1 : vector<8x128xf32>, i32 -> vector<8x128xf32>
    %c3 = arith.constant 3 : index
    %c0_38 = arith.constant 0 : index
    %c0_39 = arith.constant 0 : index
    %87 = vector.load %arg2[%c3, %c0_38, %c0_39] : memref<9x1x128xf32, #tpu.memory_space<vmem>>, vector<1x1x128xf32>
    %88 = vector.shape_cast %87 : vector<1x1x128xf32> to vector<1x128xf32>
    %89 = vector.broadcast %88 : vector<1x128xf32> to vector<8x128xf32>
    %90 = arith.mulf %86, %89 : vector<8x128xf32>
    %c24_40 = arith.constant 24 : index
    %c0_41 = arith.constant 0 : index
    %91 = vector.load %arg9[%c24_40, %c0_41] : memref<72x128xf32, #tpu.memory_space<vmem>>, vector<8x128xf32>
    tpu.vector_store %arg9[%c24_40, %c0_41], %90 {strides = array<i32>} : memref<72x128xf32, #tpu.memory_space<vmem>>, vector<8x128xf32>,
    %c32 = arith.constant 32 : index
    %c0_42 = arith.constant 0 : index
    %92 = vector.load %arg9[%c32, %c0_42] : memref<72x128xf32, #tpu.memory_space<vmem>>, vector<8x128xf32>
    tpu.vector_store %arg9[%c32, %c0_42], %2 {strides = array<i32>} : memref<72x128xf32, #tpu.memory_space<vmem>>, vector<8x128xf32>,
    %c127_i32 = arith.constant 127 : i32
    %93 = tpu.dynamic_rotate %2 by %c127_i32 dim 1 : vector<8x128xf32>, i32 -> vector<8x128xf32>
    %c5 = arith.constant 5 : index
    %c0_43 = arith.constant 0 : index
    %c0_44 = arith.constant 0 : index
    %94 = vector.load %arg2[%c5, %c0_43, %c0_44] : memref<9x1x128xf32, #tpu.memory_space<vmem>>, vector<1x1x128xf32>
    %95 = vector.shape_cast %94 : vector<1x1x128xf32> to vector<1x128xf32>
    %96 = vector.broadcast %95 : vector<1x128xf32> to vector<8x128xf32>
    %97 = arith.mulf %93, %96 : vector<8x128xf32>
    %c40 = arith.constant 40 : index
    %c0_45 = arith.constant 0 : index
    %98 = vector.load %arg9[%c40, %c0_45] : memref<72x128xf32, #tpu.memory_space<vmem>>, vector<8x128xf32>
    tpu.vector_store %arg9[%c40, %c0_45], %97 {strides = array<i32>} : memref<72x128xf32, #tpu.memory_space<vmem>>, vector<8x128xf32>,
    %c127_i32_46 = arith.constant 127 : i32
    %99 = tpu.dynamic_rotate %2 by %c127_i32_46 dim 1 : vector<8x128xf32>, i32 -> vector<8x128xf32>
    %c6 = arith.constant 6 : index
    %c0_47 = arith.constant 0 : index
    %c0_48 = arith.constant 0 : index
    %100 = vector.load %arg2[%c6, %c0_47, %c0_48] : memref<9x1x128xf32, #tpu.memory_space<vmem>>, vector<1x1x128xf32>
    %101 = vector.shape_cast %100 : vector<1x1x128xf32> to vector<1x128xf32>
    %102 = vector.broadcast %101 : vector<1x128xf32> to vector<8x128xf32>
    %103 = arith.mulf %99, %102 : vector<8x128xf32>
    %c48 = arith.constant 48 : index
    %c0_49 = arith.constant 0 : index
    %104 = vector.load %arg9[%c48, %c0_49] : memref<72x128xf32, #tpu.memory_space<vmem>>, vector<8x128xf32>
    tpu.vector_store %arg9[%c48, %c0_49], %103 {strides = array<i32>} : memref<72x128xf32, #tpu.memory_space<vmem>>, vector<8x128xf32>,
    %c126_i32 = arith.constant 126 : i32
    %105 = tpu.dynamic_rotate %2 by %c126_i32 dim 1 : vector<8x128xf32>, i32 -> vector<8x128xf32>
    %c7 = arith.constant 7 : index
    %c0_50 = arith.constant 0 : index
    %c0_51 = arith.constant 0 : index
    %106 = vector.load %arg2[%c7, %c0_50, %c0_51] : memref<9x1x128xf32, #tpu.memory_space<vmem>>, vector<1x1x128xf32>
    %107 = vector.shape_cast %106 : vector<1x1x128xf32> to vector<1x128xf32>
    %108 = vector.broadcast %107 : vector<1x128xf32> to vector<8x128xf32>
    %109 = arith.mulf %105, %108 : vector<8x128xf32>
    %c56 = arith.constant 56 : index
    %c0_52 = arith.constant 0 : index
    %110 = vector.load %arg9[%c56, %c0_52] : memref<72x128xf32, #tpu.memory_space<vmem>>, vector<8x128xf32>
    tpu.vector_store %arg9[%c56, %c0_52], %109 {strides = array<i32>} : memref<72x128xf32, #tpu.memory_space<vmem>>, vector<8x128xf32>,
    %c125_i32 = arith.constant 125 : i32
    %111 = tpu.dynamic_rotate %2 by %c125_i32 dim 1 : vector<8x128xf32>, i32 -> vector<8x128xf32>
    %c8_53 = arith.constant 8 : index
    %c0_54 = arith.constant 0 : index
    %c0_55 = arith.constant 0 : index
    %112 = vector.load %arg2[%c8_53, %c0_54, %c0_55] : memref<9x1x128xf32, #tpu.memory_space<vmem>>, vector<1x1x128xf32>
    %113 = vector.shape_cast %112 : vector<1x1x128xf32> to vector<1x128xf32>
    %114 = vector.broadcast %113 : vector<1x128xf32> to vector<8x128xf32>
    %115 = arith.mulf %111, %114 : vector<8x128xf32>
    %c64 = arith.constant 64 : index
    %c0_56 = arith.constant 0 : index
    %116 = vector.load %arg9[%c64, %c0_56] : memref<72x128xf32, #tpu.memory_space<vmem>>, vector<8x128xf32>
    tpu.vector_store %arg9[%c64, %c0_56], %115 {strides = array<i32>} : memref<72x128xf32, #tpu.memory_space<vmem>>, vector<8x128xf32>,
    %c0_57 = arith.constant 0 : index
    %c0_58 = arith.constant 0 : index
    %117 = vector.load %arg4[%c0_57, %c0_58] : memref<16x72xf32, #tpu.memory_space<vmem>>, vector<16x72xf32>
    %c0_59 = arith.constant 0 : index
    %c0_60 = arith.constant 0 : index
    %118 = vector.load %arg9[%c0_59, %c0_60] : memref<72x128xf32, #tpu.memory_space<vmem>>, vector<72x128xf32>
    %cst_61 = arith.constant dense<0.000000e+00> : vector<16x128xf32>
    %119 = tpu.matmul %117, %118, %cst_61 {dimension_numbers = #tpu.dot_dimension_numbers<[1], [0], [0], [1], [0, 0, 1, 1], [], []>} : vector<16x72xf32>, vector<72x128xf32>, vector<16x128xf32> -> vector<16x128xf32>
    %120 = vector.extract_strided_slice %5 {offsets = [16, 0], sizes = [16, 1], strides = [1, 1]} : vector<56x1xf32> to vector<16x1xf32>
    %121 = vector.broadcast %120 : vector<16x1xf32> to vector<16x128xf32>
    %122 = arith.addf %119, %121 : vector<16x128xf32>
    %123 = vector.extract_strided_slice %122 {offsets = [0, 0], sizes = [8, 128], strides = [1, 1]} : vector<16x128xf32> to vector<8x128xf32>
    %124 = vector.extract_strided_slice %122 {offsets = [8, 0], sizes = [8, 128], strides = [1, 1]} : vector<16x128xf32> to vector<8x128xf32>
    %125 = vector.extract_strided_slice %4 {offsets = [16, 0], sizes = [8, 8], strides = [1, 1]} : vector<48x8xf32> to vector<8x8xf32>
    %cst_62 = arith.constant dense<0.000000e+00> : vector<8x128xf32>
    %126 = tpu.matmul %125, %62, %cst_62 {dimension_numbers = #tpu.dot_dimension_numbers<[1], [0], [0], [1], [0, 0, 1, 1], [], []>} : vector<8x8xf32>, vector<8x128xf32>, vector<8x128xf32> -> vector<8x128xf32>
    %127 = vector.extract_strided_slice %4 {offsets = [24, 0], sizes = [8, 8], strides = [1, 1]} : vector<48x8xf32> to vector<8x8xf32>
    %128 = arith.mulf %123, %62 : vector<8x128xf32>
    %129 = arith.addf %128, %124 : vector<8x128xf32>
    %cst_63 = arith.constant dense<0.000000e+00> : vector<8x128xf32>
    %130 = tpu.matmul %127, %129, %cst_63 {dimension_numbers = #tpu.dot_dimension_numbers<[1], [0], [0], [1], [0, 0, 1, 1], [], []>} : vector<8x8xf32>, vector<8x128xf32>, vector<8x128xf32> -> vector<8x128xf32>
    %131 = arith.addf %126, %130 : vector<8x128xf32>
    %132 = vector.extract_strided_slice %5 {offsets = [32, 0], sizes = [8, 1], strides = [1, 1]} : vector<56x1xf32> to vector<8x1xf32>
    %133 = vector.broadcast %132 : vector<8x1xf32> to vector<8x128xf32>
    %134 = arith.addf %131, %133 : vector<8x128xf32>
    %135 = vector.extract_strided_slice %4 {offsets = [32, 0], sizes = [8, 8], strides = [1, 1]} : vector<48x8xf32> to vector<8x8xf32>
    %cst_64 = arith.constant dense<0.000000e+00> : vector<8x128xf32>
    %136 = tpu.matmul %135, %3, %cst_64 {dimension_numbers = #tpu.dot_dimension_numbers<[1], [0], [0], [1], [0, 0, 1, 1], [], []>} : vector<8x8xf32>, vector<8x128xf32>, vector<8x128xf32> -> vector<8x128xf32>
    %137 = vector.extract_strided_slice %4 {offsets = [40, 0], sizes = [8, 8], strides = [1, 1]} : vector<48x8xf32> to vector<8x8xf32>
    %cst_65 = arith.constant dense<0.000000e+00> : vector<8x128xf32>
    %138 = tpu.matmul %137, %67, %cst_65 {dimension_numbers = #tpu.dot_dimension_numbers<[1], [0], [0], [1], [0, 0, 1, 1], [], []>} : vector<8x8xf32>, vector<8x128xf32>, vector<8x128xf32> -> vector<8x128xf32>
    %139 = arith.addf %136, %138 : vector<8x128xf32>
    %140 = vector.extract_strided_slice %5 {offsets = [40, 0], sizes = [8, 1], strides = [1, 1]} : vector<56x1xf32> to vector<8x1xf32>
    %141 = vector.broadcast %140 : vector<8x1xf32> to vector<8x128xf32>
    %142 = arith.addf %139, %141 : vector<8x128xf32>
    %143 = math.cos %142 : vector<8x128xf32>
    %144 = arith.mulf %134, %143 : vector<8x128xf32>
    %145 = math.sin %142 : vector<8x128xf32>
    %146 = arith.mulf %134, %145 : vector<8x128xf32>
    %147 = tpu.concatenate %144, %146 in 1 : vector<8x128xf32>, vector<8x128xf32> -> vector<8x256xf32>
    %c0_66 = arith.constant 0 : index
    %c0_67 = arith.constant 0 : index
    %148 = vector.load %arg7[%c0_66, %c0_67] : memref<256x128xf32, #tpu.memory_space<vmem>>, vector<256x128xf32>
    %cst_68 = arith.constant dense<0.000000e+00> : vector<8x128xf32>
    %149 = tpu.matmul %147, %148, %cst_68 {dimension_numbers = #tpu.dot_dimension_numbers<[1], [0], [0], [1], [0, 0, 1, 1], [], []>} : vector<8x256xf32>, vector<256x128xf32>, vector<8x128xf32> -> vector<8x128xf32>
    %c0_69 = arith.constant 0 : index
    %c0_70 = arith.constant 0 : index
    %150 = vector.load %arg5[%c0_69, %c0_70] : memref<8x16xf32, #tpu.memory_space<vmem>>, vector<8x16xf32>
    %151 = vector.extract_strided_slice %150 {offsets = [0, 0], sizes = [8, 8], strides = [1, 1]} : vector<8x16xf32> to vector<8x8xf32>
    %cst_71 = arith.constant dense<0.000000e+00> : vector<8x128xf32>
    %152 = tpu.matmul %151, %149, %cst_71 {dimension_numbers = #tpu.dot_dimension_numbers<[1], [0], [0], [1], [0, 0, 1, 1], [], []>} : vector<8x8xf32>, vector<8x128xf32>, vector<8x128xf32> -> vector<8x128xf32>
    %153 = vector.extract_strided_slice %150 {offsets = [0, 8], sizes = [8, 8], strides = [1, 1]} : vector<8x16xf32> to vector<8x8xf32>
    %cst_72 = arith.constant dense<0.000000e+00> : vector<8x128xf32>
    %154 = tpu.matmul %153, %144, %cst_72 {dimension_numbers = #tpu.dot_dimension_numbers<[1], [0], [0], [1], [0, 0, 1, 1], [], []>} : vector<8x8xf32>, vector<8x128xf32>, vector<8x128xf32> -> vector<8x128xf32>
    %155 = arith.addf %152, %154 : vector<8x128xf32>
    %156 = vector.extract_strided_slice %5 {offsets = [48, 0], sizes = [8, 1], strides = [1, 1]} : vector<56x1xf32> to vector<8x1xf32>
    %157 = vector.broadcast %156 : vector<8x1xf32> to vector<8x128xf32>
    %158 = arith.addf %155, %157 : vector<8x128xf32>
    %c0_73 = arith.constant 0 : index
    %c0_74 = arith.constant 0 : index
    %159 = vector.load %arg8[%c0_73, %c0_74] : memref<8x256xf32, #tpu.memory_space<vmem>>, vector<8x128xf32>
    tpu.vector_store %arg8[%c0_73, %c0_74], %158 {strides = array<i32>} : memref<8x256xf32, #tpu.memory_space<vmem>>, vector<8x128xf32>,
    %160 = vector.extract_strided_slice %150 {offsets = [0, 8], sizes = [8, 8], strides = [1, 1]} : vector<8x16xf32> to vector<8x8xf32>
    %cst_75 = arith.constant dense<0.000000e+00> : vector<8x128xf32>
    %161 = tpu.matmul %160, %146, %cst_75 {dimension_numbers = #tpu.dot_dimension_numbers<[1], [0], [0], [1], [0, 0, 1, 1], [], []>} : vector<8x8xf32>, vector<8x128xf32>, vector<8x128xf32> -> vector<8x128xf32>
    %c0_76 = arith.constant 0 : index
    %c128 = arith.constant 128 : index
    %162 = vector.load %arg8[%c0_76, %c128] : memref<8x256xf32, #tpu.memory_space<vmem>>, vector<8x128xf32>
    tpu.vector_store %arg8[%c0_76, %c128], %161 {strides = array<i32>} : memref<8x256xf32, #tpu.memory_space<vmem>>, vector<8x128xf32>,
    return
  }
  func.func @transform_0(%arg0: i32) -> (i32, i32) {
    %c0_i32 = arith.constant 0 : i32
    %c0_i32_0 = arith.constant 0 : i32
    %c0_i32_1 = arith.constant 0 : i32
    return %c0_i32, %c0_i32_0 : i32, i32
  }
  func.func @transform_1(%arg0: i32) -> (i32, i32, i32) {
    %c0_i32 = arith.constant 0 : i32
    %c0_i32_0 = arith.constant 0 : i32
    %c0_i32_1 = arith.constant 0 : i32
    %c0_i32_2 = arith.constant 0 : i32
    return %c0_i32, %c0_i32_0, %c0_i32_1 : i32, i32, i32
  }
  func.func @transform_2(%arg0: i32) -> (i32, i32) {
    %c0_i32 = arith.constant 0 : i32
    %c0_i32_0 = arith.constant 0 : i32
    %c0_i32_1 = arith.constant 0 : i32
    return %c0_i32, %c0_i32_0 : i32, i32
  }
  func.func @transform_3(%arg0: i32) -> (i32, i32) {
    %c0_i32 = arith.constant 0 : i32
    %c0_i32_0 = arith.constant 0 : i32
    %c0_i32_1 = arith.constant 0 : i32
    return %c0_i32, %c0_i32_0 : i32, i32
  }
  func.func @transform_4(%arg0: i32) -> (i32, i32) {
    %c0_i32 = arith.constant 0 : i32
    %c0_i32_0 = arith.constant 0 : i32
    %c0_i32_1 = arith.constant 0 : i32
    return %c0_i32, %c0_i32_0 : i32, i32
  }
  func.func @transform_5(%arg0: i32) -> (i32, i32) {
    %c0_i32 = arith.constant 0 : i32
    %c0_i32_0 = arith.constant 0 : i32
    %c0_i32_1 = arith.constant 0 : i32
    return %c0_i32, %c0_i32_0 : i32, i32
  }
  func.func @transform_6(%arg0: i32) -> (i32, i32) {
    %c0_i32 = arith.constant 0 : i32
    %c0_i32_0 = arith.constant 0 : i32
    %c0_i32_1 = arith.constant 0 : i32
    return %c0_i32, %c0_i32_0 : i32, i32
  }
  func.func @transform_7(%arg0: i32) -> (i32, i32) {
    %c0_i32 = arith.constant 0 : i32
    %c0_i32_0 = arith.constant 0 : i32
    %c0_i32_1 = arith.constant 0 : i32
    return %c0_i32, %c0_i32_0 : i32, i32
  }
}

</mosaic_0001>

<llo_original>
// kernel: custom-call.1
$region0: #{custom-call.1}
  %s0 = inlined_call_operand.hbm [shape: c64[4,8,16,2], index: 0, kind: input, shape index: {}]
  %s1 = inlined_call_operand.vmem [shape: f32[4,8,16,2], index: 1, kind: output, shape index: {}]
  %s2 = scalar_lea.hbm %s0, 1024
  $region1: #{custom-call.1} parent=0
    #allocation0 [shape = 's32[1]{0}', space=sflag, size = 0x4, scoped, tag = 'scoped memory for custom-call.1']
    %3 = vsyncpa [#allocation0], 0
    %s4 = sshll.u32 %s1, 4
    %s5 = int_to_ptr.vmem [resolvable:$true] %s4
    %7 = dma.hbm_to_vmem [thread:$0]  %s2, 1024, %s5, [#allocation0]
    %8 = dma.done [#allocation0], 1024
    %9 = vsyncpa [#allocation0], 1

// kernel: custom-call
$region0: #{custom-call}
  %s0 = inlined_call_operand.hbm [shape: c64[4,8,16,2], index: 0, kind: input, shape index: {}]
  %s1 = inlined_call_operand.vmem [shape: f32[4,8,16,2], index: 1, kind: output, shape index: {}]
  $region1: #{custom-call} parent=0
    #allocation0 [shape = 's32[1]{0}', space=sflag, size = 0x4, scoped, tag = 'scoped memory for custom-call']
    %2 = vsyncpa [#allocation0], 0
    %s3 = sshll.u32 %s1, 4
    %s4 = int_to_ptr.vmem [resolvable:$true] %s3
    %6 = dma.hbm_to_vmem [thread:$0]  %s0, 1024, %s4, [#allocation0]
    %7 = dma.done [#allocation0], 1024
    %8 = vsyncpa [#allocation0], 1

// kernel: custom-call.2
$region0: #{custom-call.2}
  %s0 = inlined_call_operand.vmem [shape: f32[4,8,16,2], index: 0, kind: input, shape index: {}]
  %s1 = inlined_call_operand.vmem [shape: f32[4,8,16,2], index: 1, kind: input, shape index: {}]
  %s2 = inlined_call_operand.vmem [shape: c64[4,8,16,2], index: 2, kind: output, shape index: {}]
  %s4 = scalar_lea.vmem %s2, 128
  %v5 = vld [vmem:[%s0] sm:$0xff]
  %6 = vst [vmem:[%s2] sm:$0xff] %v5
  %s7 = scalar_lea.vmem %s2, 8
  %s8 = scalar_lea.vmem %s0, 8
  %v9 = vld [vmem:[%s8] sm:$0xff]
  %10 = vst [vmem:[%s7] sm:$0xff] %v9
  %s11 = scalar_lea.vmem %s2, 16
  %s12 = scalar_lea.vmem %s0, 16
  %v13 = vld [vmem:[%s12] sm:$0xff]
  %14 = vst [vmem:[%s11] sm:$0xff] %v13
  %s15 = scalar_lea.vmem %s2, 24
  %s16 = scalar_lea.vmem %s0, 24
  %v17 = vld [vmem:[%s16] sm:$0xff]
  %18 = vst [vmem:[%s15] sm:$0xff] %v17
  %s19 = scalar_lea.vmem %s2, 32
  %s20 = scalar_lea.vmem %s0, 32
  %v21 = vld [vmem:[%s20] sm:$0xff]
  %22 = vst [vmem:[%s19] sm:$0xff] %v21
  %s23 = scalar_lea.vmem %s2, 40
  %s24 = scalar_lea.vmem %s0, 40
  %v25 = vld [vmem:[%s24] sm:$0xff]
  %26 = vst [vmem:[%s23] sm:$0xff] %v25
  %s27 = scalar_lea.vmem %s2, 48
  %s28 = scalar_lea.vmem %s0, 48
  %v29 = vld [vmem:[%s28] sm:$0xff]
  %30 = vst [vmem:[%s27] sm:$0xff] %v29
  %s31 = scalar_lea.vmem %s2, 56
  %s32 = scalar_lea.vmem %s0, 56
  %v33 = vld [vmem:[%s32] sm:$0xff]
  %34 = vst [vmem:[%s31] sm:$0xff] %v33
  %s35 = scalar_lea.vmem %s2, 64
  %s36 = scalar_lea.vmem %s0, 64
  %v37 = vld [vmem:[%s36] sm:$0xff]
  %38 = vst [vmem:[%s35] sm:$0xff] %v37
  %s39 = scalar_lea.vmem %s2, 72
  %s40 = scalar_lea.vmem %s0, 72
  %v41 = vld [vmem:[%s40] sm:$0xff]
  %42 = vst [vmem:[%s39] sm:$0xff] %v41
  %s43 = scalar_lea.vmem %s2, 80
  %s44 = scalar_lea.vmem %s0, 80
  %v45 = vld [vmem:[%s44] sm:$0xff]
  %46 = vst [vmem:[%s43] sm:$0xff] %v45
  %s47 = scalar_lea.vmem %s2, 88
  %s48 = scalar_lea.vmem %s0, 88
  %v49 = vld [vmem:[%s48] sm:$0xff]
  %50 = vst [vmem:[%s47] sm:$0xff] %v49
  %s51 = scalar_lea.vmem %s2, 96
  %s52 = scalar_lea.vmem %s0, 96
  %v53 = vld [vmem:[%s52] sm:$0xff]
  %54 = vst [vmem:[%s51] sm:$0xff] %v53
  %s55 = scalar_lea.vmem %s2, 104
  %s56 = scalar_lea.vmem %s0, 104
  %v57 = vld [vmem:[%s56] sm:$0xff]
  %58 = vst [vmem:[%s55] sm:$0xff] %v57
  %s59 = scalar_lea.vmem %s2, 112
  %s60 = scalar_lea.vmem %s0, 112
  %v61 = vld [vmem:[%s60] sm:$0xff]
  %62 = vst [vmem:[%s59] sm:$0xff] %v61
  %s63 = scalar_lea.vmem %s2, 120
  %s64 = scalar_lea.vmem %s0, 120
  %v65 = vld [vmem:[%s64] sm:$0xff]
  %66 = vst [vmem:[%s63] sm:$0xff] %v65
  %v67 = vld [vmem:[%s1] sm:$0xff]
  %68 = vst [vmem:[%s4] sm:$0xff] %v67
  %s69 = scalar_lea.vmem %s4, 8
  %s70 = scalar_lea.vmem %s1, 8
  %v71 = vld [vmem:[%s70] sm:$0xff]
  %72 = vst [vmem:[%s69] sm:$0xff] %v71
  %s73 = scalar_lea.vmem %s4, 16
  %s74 = scalar_lea.vmem %s1, 16
  %v75 = vld [vmem:[%s74] sm:$0xff]
  %76 = vst [vmem:[%s73] sm:$0xff] %v75
  %s77 = scalar_lea.vmem %s4, 24
  %s78 = scalar_lea.vmem %s1, 24
  %v79 = vld [vmem:[%s78] sm:$0xff]
  %80 = vst [vmem:[%s77] sm:$0xff] %v79
  %s81 = scalar_lea.vmem %s4, 32
  %s82 = scalar_lea.vmem %s1, 32
  %v83 = vld [vmem:[%s82] sm:$0xff]
  %84 = vst [vmem:[%s81] sm:$0xff] %v83
  %s85 = scalar_lea.vmem %s4, 40
  %s86 = scalar_lea.vmem %s1, 40
  %v87 = vld [vmem:[%s86] sm:$0xff]
  %88 = vst [vmem:[%s85] sm:$0xff] %v87
  %s89 = scalar_lea.vmem %s4, 48
  %s90 = scalar_lea.vmem %s1, 48
  %v91 = vld [vmem:[%s90] sm:$0xff]
  %92 = vst [vmem:[%s89] sm:$0xff] %v91
  %s93 = scalar_lea.vmem %s4, 56
  %s94 = scalar_lea.vmem %s1, 56
  %v95 = vld [vmem:[%s94] sm:$0xff]
  %96 = vst [vmem:[%s93] sm:$0xff] %v95
  %s97 = scalar_lea.vmem %s4, 64
  %s98 = scalar_lea.vmem %s1, 64
  %v99 = vld [vmem:[%s98] sm:$0xff]
  %100 = vst [vmem:[%s97] sm:$0xff] %v99
  %s101 = scalar_lea.vmem %s4, 72
  %s102 = scalar_lea.vmem %s1, 72
  %v103 = vld [vmem:[%s102] sm:$0xff]
  %104 = vst [vmem:[%s101] sm:$0xff] %v103
  %s105 = scalar_lea.vmem %s4, 80
  %s106 = scalar_lea.vmem %s1, 80
  %v107 = vld [vmem:[%s106] sm:$0xff]
  %108 = vst [vmem:[%s105] sm:$0xff] %v107
  %s109 = scalar_lea.vmem %s4, 88
  %s110 = scalar_lea.vmem %s1, 88
  %v111 = vld [vmem:[%s110] sm:$0xff]
  %112 = vst [vmem:[%s109] sm:$0xff] %v111
  %s113 = scalar_lea.vmem %s4, 96
  %s114 = scalar_lea.vmem %s1, 96
  %v115 = vld [vmem:[%s114] sm:$0xff]
  %116 = vst [vmem:[%s113] sm:$0xff] %v115
  %s117 = scalar_lea.vmem %s4, 104
  %s118 = scalar_lea.vmem %s1, 104
  %v119 = vld [vmem:[%s118] sm:$0xff]
  %120 = vst [vmem:[%s117] sm:$0xff] %v119
  %s121 = scalar_lea.vmem %s4, 112
  %s122 = scalar_lea.vmem %s1, 112
  %v123 = vld [vmem:[%s122] sm:$0xff]
  %124 = vst [vmem:[%s121] sm:$0xff] %v123
  %s125 = scalar_lea.vmem %s4, 120
  %s126 = scalar_lea.vmem %s1, 120
  %v127 = vld [vmem:[%s126] sm:$0xff]
  %128 = vst [vmem:[%s125] sm:$0xff] %v127

// kernel: final_adjust.1
$region0: #{final_adjust.1}
  #allocation0 [shape = 'u32[]', space=smem, size = 0x4, offset = 0x4, fixed_abs, tag = 'smem constant byte address 0x4 - core index']
  #allocation1 [shape = 'u32[144,128]{1,0:T(1,128)}', space=vmem, size = 0x12000, scoped, tag = 'internal scratch']
  #allocation2 [shape = 'f32[72,128]{1,0:T(8,128)}', space=vmem, size = 0x9000, scoped, tag = 'scratch operand']
  %s0 = inlined_call_operand.vmem [shape: f32[32,128], index: 0, kind: input, shape index: {}]
  %s1 = inlined_call_operand.vmem [shape: f32[9,1,128], index: 1, kind: input, shape index: {}]
  %s2 = inlined_call_operand.vmem [shape: f32[48,8], index: 2, kind: input, shape index: {}]
  %s3 = inlined_call_operand.vmem [shape: f32[16,72], index: 3, kind: input, shape index: {}]
  %s4 = inlined_call_operand.vmem [shape: f32[8,16], index: 4, kind: input, shape index: {}]
  %s5 = inlined_call_operand.vmem [shape: f32[56,1], index: 5, kind: input, shape index: {}]
  %s6 = inlined_call_operand.vmem [shape: f32[256,128], index: 6, kind: input, shape index: {}]
  %s7 = inlined_call_operand.vmem [shape: f32[8,256], index: 7, kind: output, shape index: {}]
  %s8 = sld [smem:[#allocation0]]
  $region38: #{final_adjust.1} parent=0
    _
  %s10 = ssub.s32 1, %s8
  %s11 = scalar_select 0, %s10, %s8
  // Predicated region
  $region2: #{final_adjust.1} parent=0 // pred_check
    _
  $region3: #{final_adjust.1} parent=0 // pred_check_branch
    %13 = sbr.rel (0) target = $region5
  $region4: #{final_adjust.1} parent=0 // pred_region
    _
  $region5: #{final_adjust.1} parent=0 // pred_fallthru
    _
  // Predicated region
  $region6: #{final_adjust.1} parent=0 // pred_check
    _
  $region7: #{final_adjust.1} parent=0 // pred_check_branch
    %15 = sbr.rel (0) target = $region9
  $region8: #{final_adjust.1} parent=0 // pred_region
    _
  $region9: #{final_adjust.1} parent=0 // pred_fallthru
    _
  // Predicated region
  $region10: #{final_adjust.1} parent=0 // pred_check
    _
  $region11: #{final_adjust.1} parent=0 // pred_check_branch
    %17 = sbr.rel (0) target = $region13
  $region12: #{final_adjust.1} parent=0 // pred_region
    _
  $region13: #{final_adjust.1} parent=0 // pred_fallthru
    _
  // Predicated region
  $region14: #{final_adjust.1} parent=0 // pred_check
    _
  $region15: #{final_adjust.1} parent=0 // pred_check_branch
    %19 = sbr.rel (0) target = $region17
  $region16: #{final_adjust.1} parent=0 // pred_region
    _
  $region17: #{final_adjust.1} parent=0 // pred_fallthru
    _
  // Predicated region
  $region18: #{final_adjust.1} parent=0 // pred_check
    _
  $region19: #{final_adjust.1} parent=0 // pred_check_branch
    %21 = sbr.rel (0) target = $region21
  $region20: #{final_adjust.1} parent=0 // pred_region
    _
  $region21: #{final_adjust.1} parent=0 // pred_fallthru
    _
  // Predicated region
  $region22: #{final_adjust.1} parent=0 // pred_check
    _
  $region23: #{final_adjust.1} parent=0 // pred_check_branch
    %23 = sbr.rel (0) target = $region25
  $region24: #{final_adjust.1} parent=0 // pred_region
    _
  $region25: #{final_adjust.1} parent=0 // pred_fallthru
    _
  // Predicated region
  $region26: #{final_adjust.1} parent=0 // pred_check
    _
  $region27: #{final_adjust.1} parent=0 // pred_check_branch
    %25 = sbr.rel (0) target = $region29
  $region28: #{final_adjust.1} parent=0 // pred_region
    _
  $region29: #{final_adjust.1} parent=0 // pred_fallthru
    _
  %v26 = vld [vmem:[%s0] sm:$0xff]
  %v27 = vld [vmem:[%s0 + $0x8] sm:$0xff]
  %v28 = vld [vmem:[%s0 + $0x10] sm:$0xff]
  %v29 = vld [vmem:[%s0 + $0x18] sm:$0xff]
  %v30 = vld [vmem:[%s2] sm:$0xff]
  %v31 = vld [vmem:[%s2 + $0x8] sm:$0xff]
  %v32 = vld [vmem:[%s2 + $0x10] sm:$0xff]
  %v33 = vld [vmem:[%s2 + $0x18] sm:$0xff]
  %v34 = vld [vmem:[%s2 + $0x20] sm:$0xff]
  %v35 = vld [vmem:[%s2 + $0x28] sm:$0xff]
  %v36 = vld [vmem:[%s5] sm:$0xff]
  %v37 = vld [vmem:[%s5 + $0x8] sm:$0xff]
  %v38 = vld [vmem:[%s5 + $0x10] sm:$0xff]
  %v39 = vld [vmem:[%s5 + $0x18] sm:$0xff]
  %v40 = vld [vmem:[%s5 + $0x20] sm:$0xff]
  %v41 = vld [vmem:[%s5 + $0x28] sm:$0xff]
  %v42 = vld [vmem:[%s5 + $0x30] sm:$0xff]
  %v43 = vmul.f32 %v26, %v26
  %v44 = vmul.f32 %v27, %v27
  %v45 = vadd.f32 %v43, %v44
  %v46 = vrsqrt.pop %v45
  %v47 = vmul.f32 %v45, %v46
  %vm48 = vcmp.eq.f32.partialorder %v45, inf
  %v49 = vsel %vm48, %v45, %v47
  %vm50 = vcmp.eq.f32.partialorder %v45, 0.0
  %v51 = vand.u32 %v45, 2147483648
  %v52 = vsel %vm50, %v51, %v49
  %v53 = vand.u32 2147483647, %v26
  %v54 = vand.u32 2147483647, %v27
  %v55 = vmax.f32 %v53, %v54
  %v56 = vmin.f32 %v53, %v54
  %vm57 = vcmp.gt.f32.partialorder %v55, 0.0
  %v58 = vsel %vm57, %v55, 1.0
  %v59 = vrcp.pop %v58
  %v60 = vmul.f32 %v56, %v59
  %vm61 = vcmp.gt.f32.partialorder %v60, 0.41421357
  %v62 = vsub.f32 %v60, 1.0
  %v63 = vadd.f32 %v60, 1.0
  %v64 = vrcp.pop %v63
  %v65 = vmul.f32 %v62, %v64
  %v66 = vsel %vm61, %v65, %v60
  %v67 = vmul.f32 %v66, %v66
  %v68 = vmul.f32 %v67, 0.080537446
  %v69 = vsub.f32 %v68, 0.13877685
  %v70 = vmul.f32 %v69, %v67
  %v71 = vadd.f32 %v70, 0.19977711
  %v72 = vmul.f32 %v71, %v67
  %v73 = vsub.f32 %v72, 0.3333295
  %v74 = vmul.f32 %v73, %v67
  %v75 = vmul.f32 %v74, %v66
  %v76 = vadd.f32 %v75, %v66
  %v77 = vadd.f32 %v76, 0.7853982
  %v78 = vsel %vm61, %v77, %v76
  %vm79 = vcmp.gt.f32.partialorder %v54, %v53
  %v80 = vsub.f32 1.5707964, %v78
  %v81 = vsel %vm79, %v80, %v78
  %vm82 = vcmp.lt.f32.partialorder %v26, 0.0
  %v83 = vsub.f32 3.1415927, %v81
  %v84 = vsel %vm82, %v83, %v81
  %vm85 = vcmp.lt.f32.partialorder %v27, 0.0
  %v86 = vsub.f32 0.0, %v84
  %v87 = vsel %vm85, %v86, %v84
  %89 = vset.pattern.permute.xlu0 0
  %90 = vperm.xlu0 %89, %v36
  %v91 = vpop.permute.xlu0 %90
  %vm93 = vcmask 64512
  %v95 = vsel %vm93, %v30, 0
  %97 = vmatprep.subr.mxu0 0.0
  %98 = vmatpush1.msra.mxu0 %v52
  %99 = vmatprep.subr.mxu0 0.0
  %100 = vmatpush1.msra.mxu0 0.0
  %101 = vmatprep.subr.mxu0 0.0
  %102 = vmatpush1.msra.mxu0 0.0
  %103 = vmatprep.subr.mxu0 0.0
  %104 = vmatpush1.msra.mxu0 0.0
  %105 = vmatprep.subr.mxu0 0.0
  %106 = vmatpush1.msra.mxu0 0.0
  %107 = vmatprep.subr.mxu0 0.0
  %108 = vmatpush1.msra.mxu0 0.0
  %109 = vmatprep.subr.mxu0 0.0
  %110 = vmatpush1.msra.mxu0 0.0
  %111 = vmatprep.subr.mxu0 0.0
  %112 = vmatpush1.msra.mxu0 0.0
  %113 = vmatprep.subr.mxu0 0.0
  %114 = vmatpush1.msra.mxu0 0.0
  %115 = vmatprep.subr.mxu0 0.0
  %116 = vmatpush1.msra.mxu0 0.0
  %117 = vmatprep.subr.mxu0 0.0
  %118 = vmatpush1.msra.mxu0 0.0
  %119 = vmatprep.subr.mxu0 0.0
  %120 = vmatpush1.msra.mxu0 0.0
  %121 = vmatprep.subr.mxu0 0.0
  %122 = vmatpush1.msra.mxu0 0.0
  %123 = vmatprep.subr.mxu0 0.0
  %124 = vmatpush1.msra.mxu0 0.0
  %125 = vmatprep.subr.mxu0 0.0
  %126 = vmatpush1.msra.mxu0 0.0
  %127 = vmatprep.subr.mxu0 0.0
  %128 = vmatpush1.msra.mxu0 0.0
  %129 = vmatprep.subr.mxu0 0.0
  %130 = vmatpush1.msra.mxu0 0.0
  %131 = vmatprep.subr.mxu0 0.0
  %132 = vmatpush1.msra.mxu0 0.0
  %133 = vmatprep.subr.mxu0 0.0
  %134 = vmatpush1.msra.mxu0 0.0
  %135 = vmatprep.subr.mxu0 0.0
  %136 = vmatpush1.msra.mxu0 0.0
  %137 = vmatprep.subr.mxu0 0.0
  %138 = vmatpush1.msra.mxu0 0.0
  %139 = vmatprep.subr.mxu0 0.0
  %140 = vmatpush1.msra.mxu0 0.0
  %141 = vmatprep.subr.mxu0 0.0
  %142 = vmatpush1.msra.mxu0 0.0
  %143 = vmatprep.subr.mxu0 0.0
  %144 = vmatpush1.msra.mxu0 0.0
  %145 = vmatprep.subr.mxu0 0.0
  %146 = vmatpush1.msra.mxu0 0.0
  %147 = vmatprep.subr.mxu0 0.0
  %148 = vmatpush1.msra.mxu0 0.0
  %149 = vmatprep.subr.mxu0 0.0
  %150 = vmatpush1.msra.mxu0 0.0
  %151 = vmatprep.subr.mxu0 0.0
  %152 = vmatpush1.msra.mxu0 0.0
  %153 = vmatprep.subr.mxu0 0.0
  %154 = vmatpush1.msra.mxu0 0.0
  %155 = vmatprep.subr.mxu0 0.0
  %156 = vmatpush1.msra.mxu0 0.0
  %157 = vmatprep.subr.mxu0 0.0
  %158 = vmatpush1.msra.mxu0 0.0
  %159 = vmatprep.subr.mxu0 0.0
  %160 = vmatpush1.msra.mxu0 0.0
  %161 = vmatprep.mubr.f32.mxu0 0.0
  %162 = vmatmul.mubr.f32.gmra.mrb[0].mxu0 %v95
  %v163 = vpop.f32.mrb[0].mxu0
  %v164 = vadd.f32 %v91, %v163
  %v165 = vpop.f32.mrb[0].mxu0
  %166 = vdwg.mxu0
  %168 = vset.pattern.permute.xlu0 0
  %169 = vperm.xlu0 %168, %v37
  %v170 = vpop.permute.xlu0 %169
  %v173 = vsel %vm93, %v31, 0
  %175 = vmatprep.subr.mxu0 0.0
  %176 = vmatpush1.msra.mxu0 %v87
  %177 = vmatprep.subr.mxu0 0.0
  %178 = vmatpush1.msra.mxu0 0.0
  %179 = vmatprep.subr.mxu0 0.0
  %180 = vmatpush1.msra.mxu0 0.0
  %181 = vmatprep.subr.mxu0 0.0
  %182 = vmatpush1.msra.mxu0 0.0
  %183 = vmatprep.subr.mxu0 0.0
  %184 = vmatpush1.msra.mxu0 0.0
  %185 = vmatprep.subr.mxu0 0.0
  %186 = vmatpush1.msra.mxu0 0.0
  %187 = vmatprep.subr.mxu0 0.0
  %188 = vmatpush1.msra.mxu0 0.0
  %189 = vmatprep.subr.mxu0 0.0
  %190 = vmatpush1.msra.mxu0 0.0
  %191 = vmatprep.subr.mxu0 0.0
  %192 = vmatpush1.msra.mxu0 0.0
  %193 = vmatprep.subr.mxu0 0.0
  %194 = vmatpush1.msra.mxu0 0.0
  %195 = vmatprep.subr.mxu0 0.0
  %196 = vmatpush1.msra.mxu0 0.0
  %197 = vmatprep.subr.mxu0 0.0
  %198 = vmatpush1.msra.mxu0 0.0
  %199 = vmatprep.subr.mxu0 0.0
  %200 = vmatpush1.msra.mxu0 0.0
  %201 = vmatprep.subr.mxu0 0.0
  %202 = vmatpush1.msra.mxu0 0.0
  %203 = vmatprep.subr.mxu0 0.0
  %204 = vmatpush1.msra.mxu0 0.0
  %205 = vmatprep.subr.mxu0 0.0
  %206 = vmatpush1.msra.mxu0 0.0
  %207 = vmatprep.subr.mxu0 0.0
  %208 = vmatpush1.msra.mxu0 0.0
  %209 = vmatprep.subr.mxu0 0.0
  %210 = vmatpush1.msra.mxu0 0.0
  %211 = vmatprep.subr.mxu0 0.0
  %212 = vmatpush1.msra.mxu0 0.0
  %213 = vmatprep.subr.mxu0 0.0
  %214 = vmatpush1.msra.mxu0 0.0
  %215 = vmatprep.subr.mxu0 0.0
  %216 = vmatpush1.msra.mxu0 0.0
  %217 = vmatprep.subr.mxu0 0.0
  %218 = vmatpush1.msra.mxu0 0.0
  %219 = vmatprep.subr.mxu0 0.0
  %220 = vmatpush1.msra.mxu0 0.0
  %221 = vmatprep.subr.mxu0 0.0
  %222 = vmatpush1.msra.mxu0 0.0
  %223 = vmatprep.subr.mxu0 0.0
  %224 = vmatpush1.msra.mxu0 0.0
  %225 = vmatprep.subr.mxu0 0.0
  %226 = vmatpush1.msra.mxu0 0.0
  %227 = vmatprep.subr.mxu0 0.0
  %228 = vmatpush1.msra.mxu0 0.0
  %229 = vmatprep.subr.mxu0 0.0
  %230 = vmatpush1.msra.mxu0 0.0
  %231 = vmatprep.subr.mxu0 0.0
  %232 = vmatpush1.msra.mxu0 0.0
  %233 = vmatprep.subr.mxu0 0.0
  %234 = vmatpush1.msra.mxu0 0.0
  %235 = vmatprep.subr.mxu0 0.0
  %236 = vmatpush1.msra.mxu0 0.0
  %237 = vmatprep.subr.mxu0 0.0
  %238 = vmatpush1.msra.mxu0 0.0
  %239 = vmatprep.mubr.f32.mxu0 0.0
  %240 = vmatmul.mubr.f32.gmra.mrb[0].mxu0 %v173
  %v241 = vpop.f32.mrb[0].mxu0
  %v242 = vadd.f32 %v170, %v241
  %v243 = vpop.f32.mrb[0].mxu0
  %244 = vdwg.mxu0
  %245 = vrot.lane.b32.xlu0 %v28, 3
  %v246 = vpop.permute.xlu0 %245
  %v247 = vld [vmem:[%s1] sm:$0x1]
  %v249 = vlaneseq
  %v250 = vshrl.u32 %v249, 7
  %v251 = vsub.s32 0, %v250
  %v252 = vrot.slane %v247, %v251
  %v254 = vmul.f32 %v246, %v252
  %255 = vst [vmem:[#allocation2] sm:$0xff] %v254
  %256 = vrot.lane.b32.xlu0 %v28, 2
  %v257 = vpop.permute.xlu0 %256
  %s258 = scalar_lea.vmem %s1, 1
  %v259 = vld [vmem:[%s258] sm:$0x1]
  %v261 = vlaneseq
  %v262 = vshrl.u32 %v261, 7
  %v263 = vsub.s32 0, %v262
  %v264 = vrot.slane %v259, %v263
  %v266 = vmul.f32 %v257, %v264
  %267 = vst [vmem:[#allocation2 + $0x8] sm:$0xff] %v266
  %268 = vrot.lane.b32.xlu0 %v28, 1
  %v269 = vpop.permute.xlu0 %268
  %s270 = scalar_lea.vmem %s1, 2
  %v271 = vld [vmem:[%s270] sm:$0x1]
  %v273 = vlaneseq
  %v274 = vshrl.u32 %v273, 7
  %v275 = vsub.s32 0, %v274
  %v276 = vrot.slane %v271, %v275
  %v278 = vmul.f32 %v269, %v276
  %279 = vst [vmem:[#allocation2 + $0x10] sm:$0xff] %v278
  %s280 = scalar_lea.vmem %s1, 3
  %v281 = vld [vmem:[%s280] sm:$0x1]
  %v283 = vlaneseq
  %v284 = vshrl.u32 %v283, 7
  %v285 = vsub.s32 0, %v284
  %v286 = vrot.slane %v281, %v285
  %v288 = vmul.f32 %v269, %v286
  %289 = vst [vmem:[#allocation2 + $0x18] sm:$0xff] %v288
  %290 = vst [vmem:[#allocation2 + $0x20] sm:$0xff] %v28
  %291 = vrot.lane.b32.xlu0 %v28, 127
  %v292 = vpop.permute.xlu0 %291
  %s293 = scalar_lea.vmem %s1, 5
  %v294 = vld [vmem:[%s293] sm:$0x1]
  %v296 = vlaneseq
  %v297 = vshrl.u32 %v296, 7
  %v298 = vsub.s32 0, %v297
  %v299 = vrot.slane %v294, %v298
  %v301 = vmul.f32 %v292, %v299
  %302 = vst [vmem:[#allocation2 + $0x28] sm:$0xff] %v301
  %s303 = scalar_lea.vmem %s1, 6
  %v304 = vld [vmem:[%s303] sm:$0x1]
  %v306 = vlaneseq
  %v307 = vshrl.u32 %v306, 7
  %v308 = vsub.s32 0, %v307
  %v309 = vrot.slane %v304, %v308
  %v311 = vmul.f32 %v292, %v309
  %312 = vst [vmem:[#allocation2 + $0x30] sm:$0xff] %v311
  %313 = vrot.lane.b32.xlu0 %v28, 126
  %v314 = vpop.permute.xlu0 %313
  %s315 = scalar_lea.vmem %s1, 7
  %v316 = vld [vmem:[%s315] sm:$0x1]
  %v318 = vlaneseq
  %v319 = vshrl.u32 %v318, 7
  %v320 = vsub.s32 0, %v319
  %v321 = vrot.slane %v316, %v320
  %v323 = vmul.f32 %v314, %v321
  %324 = vst [vmem:[#allocation2 + $0x38] sm:$0xff] %v323
  %325 = vrot.lane.b32.xlu0 %v28, 125
  %v326 = vpop.permute.xlu0 %325
  %s327 = scalar_lea.vmem %s1, 8
  %v328 = vld [vmem:[%s327] sm:$0x1]
  %v330 = vlaneseq
  %v331 = vshrl.u32 %v330, 7
  %v332 = vsub.s32 0, %v331
  %v333 = vrot.slane %v328, %v332
  %v335 = vmul.f32 %v326, %v333
  %336 = vst [vmem:[#allocation2 + $0x40] sm:$0xff] %v335
  %v337 = vld [vmem:[%s3] sm:$0xff]
  %v338 = vld [vmem:[%s3 + $0x8] sm:$0xff]
  %v339 = vld [vmem:[#allocation2] sm:$0xff]
  %v340 = vld [vmem:[#allocation2 + $0x8] sm:$0xff]
  %v341 = vld [vmem:[#allocation2 + $0x10] sm:$0xff]
  %v342 = vld [vmem:[#allocation2 + $0x18] sm:$0xff]
  %v343 = vld [vmem:[#allocation2 + $0x20] sm:$0xff]
  %v344 = vld [vmem:[#allocation2 + $0x28] sm:$0xff]
  %v345 = vld [vmem:[#allocation2 + $0x30] sm:$0xff]
  %v346 = vld [vmem:[#allocation2 + $0x38] sm:$0xff]
  %v347 = vld [vmem:[#allocation2 + $0x40] sm:$0xff]
  %349 = vset.pattern.permute.xlu0 0
  %350 = vperm.xlu0 %349, %v38
  %v351 = vpop.permute.xlu0 %350
  %354 = vset.pattern.permute.xlu0 0
  %355 = vperm.xlu0 %354, %v39
  %v356 = vpop.permute.xlu0 %355
  %vm358 = vcmask 588800
  %v360 = vsel %vm358, %v337, 0
  %v363 = vsel %vm358, %v338, 0
  %365 = vmatprep.subr.mxu0 0.0
  %366 = vmatpush1.msra.mxu0 %v339
  %367 = vmatprep.subr.mxu0 0.0
  %368 = vmatpush1.msra.mxu0 %v340
  %369 = vmatprep.subr.mxu0 0.0
  %370 = vmatpush1.msra.mxu0 %v341
  %371 = vmatprep.subr.mxu0 0.0
  %372 = vmatpush1.msra.mxu0 %v342
  %373 = vmatprep.subr.mxu0 0.0
  %374 = vmatpush1.msra.mxu0 %v343
  %375 = vmatprep.subr.mxu0 0.0
  %376 = vmatpush1.msra.mxu0 %v344
  %377 = vmatprep.subr.mxu0 0.0
  %378 = vmatpush1.msra.mxu0 %v345
  %379 = vmatprep.subr.mxu0 0.0
  %380 = vmatpush1.msra.mxu0 %v346
  %381 = vmatprep.subr.mxu0 0.0
  %382 = vmatpush1.msra.mxu0 %v347
  %383 = vmatprep.subr.mxu0 0.0
  %384 = vmatpush1.msra.mxu0 0.0
  %385 = vmatprep.subr.mxu0 0.0
  %386 = vmatpush1.msra.mxu0 0.0
  %387 = vmatprep.subr.mxu0 0.0
  %388 = vmatpush1.msra.mxu0 0.0
  %389 = vmatprep.subr.mxu0 0.0
  %390 = vmatpush1.msra.mxu0 0.0
  %391 = vmatprep.subr.mxu0 0.0
  %392 = vmatpush1.msra.mxu0 0.0
  %393 = vmatprep.subr.mxu0 0.0
  %394 = vmatpush1.msra.mxu0 0.0
  %395 = vmatprep.subr.mxu0 0.0
  %396 = vmatpush1.msra.mxu0 0.0
  %397 = vmatprep.subr.mxu0 0.0
  %398 = vmatpush1.msra.mxu0 0.0
  %399 = vmatprep.subr.mxu0 0.0
  %400 = vmatpush1.msra.mxu0 0.0
  %401 = vmatprep.subr.mxu0 0.0
  %402 = vmatpush1.msra.mxu0 0.0
  %403 = vmatprep.subr.mxu0 0.0
  %404 = vmatpush1.msra.mxu0 0.0
  %405 = vmatprep.subr.mxu0 0.0
  %406 = vmatpush1.msra.mxu0 0.0
  %407 = vmatprep.subr.mxu0 0.0
  %408 = vmatpush1.msra.mxu0 0.0
  %409 = vmatprep.subr.mxu0 0.0
  %410 = vmatpush1.msra.mxu0 0.0
  %411 = vmatprep.subr.mxu0 0.0
  %412 = vmatpush1.msra.mxu0 0.0
  %413 = vmatprep.subr.mxu0 0.0
  %414 = vmatpush1.msra.mxu0 0.0
  %415 = vmatprep.subr.mxu0 0.0
  %416 = vmatpush1.msra.mxu0 0.0
  %417 = vmatprep.subr.mxu0 0.0
  %418 = vmatpush1.msra.mxu0 0.0
  %419 = vmatprep.subr.mxu0 0.0
  %420 = vmatpush1.msra.mxu0 0.0
  %421 = vmatprep.subr.mxu0 0.0
  %422 = vmatpush1.msra.mxu0 0.0
  %423 = vmatprep.subr.mxu0 0.0
  %424 = vmatpush1.msra.mxu0 0.0
  %425 = vmatprep.subr.mxu0 0.0
  %426 = vmatpush1.msra.mxu0 0.0
  %427 = vmatprep.subr.mxu0 0.0
  %428 = vmatpush1.msra.mxu0 0.0
  %429 = vmatprep.mubr.f32.mxu0 0.0
  %430 = vmatmul.mubr.f32.gmra.mrb[0].mxu0 %v360
  %v431 = vpop.f32.mrb[0].mxu0
  %v432 = vadd.f32 %v351, %v431
  %v433 = vpop.f32.mrb[0].mxu0
  %434 = vmatprep.mubr.f32.mxu0 0.0
  %435 = vmatmul.mubr.f32.gmra.mrb[0].mxu0 %v363
  %v436 = vpop.f32.mrb[0].mxu0
  %v437 = vadd.f32 %v356, %v436
  %v438 = vpop.f32.mrb[0].mxu0
  %439 = vdwg.mxu0
  %v440 = vmul.f32 %v432, %v164
  %v441 = vadd.f32 %v440, %v437
  %v443 = vsel %vm93, %v33, 0
  %445 = vmatprep.subr.mxu0 0.0
  %446 = vmatpush1.msra.mxu0 %v441
  %447 = vmatprep.subr.mxu0 0.0
  %448 = vmatpush1.msra.mxu0 0.0
  %449 = vmatprep.subr.mxu0 0.0
  %450 = vmatpush1.msra.mxu0 0.0
  %451 = vmatprep.subr.mxu0 0.0
  %452 = vmatpush1.msra.mxu0 0.0
  %453 = vmatprep.subr.mxu0 0.0
  %454 = vmatpush1.msra.mxu0 0.0
  %455 = vmatprep.subr.mxu0 0.0
  %456 = vmatpush1.msra.mxu0 0.0
  %457 = vmatprep.subr.mxu0 0.0
  %458 = vmatpush1.msra.mxu0 0.0
  %459 = vmatprep.subr.mxu0 0.0
  %460 = vmatpush1.msra.mxu0 0.0
  %461 = vmatprep.subr.mxu0 0.0
  %462 = vmatpush1.msra.mxu0 0.0
  %463 = vmatprep.subr.mxu0 0.0
  %464 = vmatpush1.msra.mxu0 0.0
  %465 = vmatprep.subr.mxu0 0.0
  %466 = vmatpush1.msra.mxu0 0.0
  %467 = vmatprep.subr.mxu0 0.0
  %468 = vmatpush1.msra.mxu0 0.0
  %469 = vmatprep.subr.mxu0 0.0
  %470 = vmatpush1.msra.mxu0 0.0
  %471 = vmatprep.subr.mxu0 0.0
  %472 = vmatpush1.msra.mxu0 0.0
  %473 = vmatprep.subr.mxu0 0.0
  %474 = vmatpush1.msra.mxu0 0.0
  %475 = vmatprep.subr.mxu0 0.0
  %476 = vmatpush1.msra.mxu0 0.0
  %477 = vmatprep.subr.mxu0 0.0
  %478 = vmatpush1.msra.mxu0 0.0
  %479 = vmatprep.subr.mxu0 0.0
  %480 = vmatpush1.msra.mxu0 0.0
  %481 = vmatprep.subr.mxu0 0.0
  %482 = vmatpush1.msra.mxu0 0.0
  %483 = vmatprep.subr.mxu0 0.0
  %484 = vmatpush1.msra.mxu0 0.0
  %485 = vmatprep.subr.mxu0 0.0
  %486 = vmatpush1.msra.mxu0 0.0
  %487 = vmatprep.subr.mxu0 0.0
  %488 = vmatpush1.msra.mxu0 0.0
  %489 = vmatprep.subr.mxu0 0.0
  %490 = vmatpush1.msra.mxu0 0.0
  %491 = vmatprep.subr.mxu0 0.0
  %492 = vmatpush1.msra.mxu0 0.0
  %493 = vmatprep.subr.mxu0 0.0
  %494 = vmatpush1.msra.mxu0 0.0
  %495 = vmatprep.subr.mxu0 0.0
  %496 = vmatpush1.msra.mxu0 0.0
  %497 = vmatprep.subr.mxu0 0.0
  %498 = vmatpush1.msra.mxu0 0.0
  %499 = vmatprep.subr.mxu0 0.0
  %500 = vmatpush1.msra.mxu0 0.0
  %501 = vmatprep.subr.mxu0 0.0
  %502 = vmatpush1.msra.mxu0 0.0
  %503 = vmatprep.subr.mxu0 0.0
  %504 = vmatpush1.msra.mxu0 0.0
  %505 = vmatprep.subr.mxu0 0.0
  %506 = vmatpush1.msra.mxu0 0.0
  %507 = vmatprep.subr.mxu0 0.0
  %508 = vmatpush1.msra.mxu0 0.0
  %509 = vmatprep.mubr.f32.mxu0 0.0
  %510 = vmatmul.mubr.f32.gmra.mrb[0].mxu0 %v443
  %v511 = vpop.f32.mrb[0].mxu0
  %v512 = vadd.f32 0.0, %v511
  %v513 = vpop.f32.mrb[0].mxu0
  %514 = vdwg.mxu0
  %v516 = vsel %vm93, %v32, 0
  %518 = vmatprep.subr.mxu0 0.0
  %519 = vmatpush1.msra.mxu0 %v164
  %520 = vmatprep.subr.mxu0 0.0
  %521 = vmatpush1.msra.mxu0 0.0
  %522 = vmatprep.subr.mxu0 0.0
  %523 = vmatpush1.msra.mxu0 0.0
  %524 = vmatprep.subr.mxu0 0.0
  %525 = vmatpush1.msra.mxu0 0.0
  %526 = vmatprep.subr.mxu0 0.0
  %527 = vmatpush1.msra.mxu0 0.0
  %528 = vmatprep.subr.mxu0 0.0
  %529 = vmatpush1.msra.mxu0 0.0
  %530 = vmatprep.subr.mxu0 0.0
  %531 = vmatpush1.msra.mxu0 0.0
  %532 = vmatprep.subr.mxu0 0.0
  %533 = vmatpush1.msra.mxu0 0.0
  %534 = vmatprep.subr.mxu0 0.0
  %535 = vmatpush1.msra.mxu0 0.0
  %536 = vmatprep.subr.mxu0 0.0
  %537 = vmatpush1.msra.mxu0 0.0
  %538 = vmatprep.subr.mxu0 0.0
  %539 = vmatpush1.msra.mxu0 0.0
  %540 = vmatprep.subr.mxu0 0.0
  %541 = vmatpush1.msra.mxu0 0.0
  %542 = vmatprep.subr.mxu0 0.0
  %543 = vmatpush1.msra.mxu0 0.0
  %544 = vmatprep.subr.mxu0 0.0
  %545 = vmatpush1.msra.mxu0 0.0
  %546 = vmatprep.subr.mxu0 0.0
  %547 = vmatpush1.msra.mxu0 0.0
  %548 = vmatprep.subr.mxu0 0.0
  %549 = vmatpush1.msra.mxu0 0.0
  %550 = vmatprep.subr.mxu0 0.0
  %551 = vmatpush1.msra.mxu0 0.0
  %552 = vmatprep.subr.mxu0 0.0
  %553 = vmatpush1.msra.mxu0 0.0
  %554 = vmatprep.subr.mxu0 0.0
  %555 = vmatpush1.msra.mxu0 0.0
  %556 = vmatprep.subr.mxu0 0.0
  %557 = vmatpush1.msra.mxu0 0.0
  %558 = vmatprep.subr.mxu0 0.0
  %559 = vmatpush1.msra.mxu0 0.0
  %560 = vmatprep.subr.mxu0 0.0
  %561 = vmatpush1.msra.mxu0 0.0
  %562 = vmatprep.subr.mxu0 0.0
  %563 = vmatpush1.msra.mxu0 0.0
  %564 = vmatprep.subr.mxu0 0.0
  %565 = vmatpush1.msra.mxu0 0.0
  %566 = vmatprep.subr.mxu0 0.0
  %567 = vmatpush1.msra.mxu0 0.0
  %568 = vmatprep.subr.mxu0 0.0
  %569 = vmatpush1.msra.mxu0 0.0
  %570 = vmatprep.subr.mxu0 0.0
  %571 = vmatpush1.msra.mxu0 0.0
  %572 = vmatprep.subr.mxu0 0.0
  %573 = vmatpush1.msra.mxu0 0.0
  %574 = vmatprep.subr.mxu0 0.0
  %575 = vmatpush1.msra.mxu0 0.0
  %576 = vmatprep.subr.mxu0 0.0
  %577 = vmatpush1.msra.mxu0 0.0
  %578 = vmatprep.subr.mxu0 0.0
  %579 = vmatpush1.msra.mxu0 0.0
  %580 = vmatprep.subr.mxu0 0.0
  %581 = vmatpush1.msra.mxu0 0.0
  %582 = vmatprep.mubr.f32.mxu0 0.0
  %583 = vmatmul.mubr.f32.gmra.mrb[0].mxu0 %v516
  %v584 = vpop.f32.mrb[0].mxu0
  %v585 = vadd.f32 %v512, %v584
  %v586 = vpop.f32.mrb[0].mxu0
  %587 = vdwg.mxu0
  %589 = vset.pattern.permute.xlu0 0
  %590 = vperm.xlu0 %589, %v40
  %v591 = vpop.permute.xlu0 %590
  %v593 = vadd.f32 %v585, %v591
  %v595 = vsel %vm93, %v35, 0
  %597 = vmatprep.subr.mxu0 0.0
  %598 = vmatpush1.msra.mxu0 %v242
  %599 = vmatprep.subr.mxu0 0.0
  %600 = vmatpush1.msra.mxu0 0.0
  %601 = vmatprep.subr.mxu0 0.0
  %602 = vmatpush1.msra.mxu0 0.0
  %603 = vmatprep.subr.mxu0 0.0
  %604 = vmatpush1.msra.mxu0 0.0
  %605 = vmatprep.subr.mxu0 0.0
  %606 = vmatpush1.msra.mxu0 0.0
  %607 = vmatprep.subr.mxu0 0.0
  %608 = vmatpush1.msra.mxu0 0.0
  %609 = vmatprep.subr.mxu0 0.0
  %610 = vmatpush1.msra.mxu0 0.0
  %611 = vmatprep.subr.mxu0 0.0
  %612 = vmatpush1.msra.mxu0 0.0
  %613 = vmatprep.subr.mxu0 0.0
  %614 = vmatpush1.msra.mxu0 0.0
  %615 = vmatprep.subr.mxu0 0.0
  %616 = vmatpush1.msra.mxu0 0.0
  %617 = vmatprep.subr.mxu0 0.0
  %618 = vmatpush1.msra.mxu0 0.0
  %619 = vmatprep.subr.mxu0 0.0
  %620 = vmatpush1.msra.mxu0 0.0
  %621 = vmatprep.subr.mxu0 0.0
  %622 = vmatpush1.msra.mxu0 0.0
  %623 = vmatprep.subr.mxu0 0.0
  %624 = vmatpush1.msra.mxu0 0.0
  %625 = vmatprep.subr.mxu0 0.0
  %626 = vmatpush1.msra.mxu0 0.0
  %627 = vmatprep.subr.mxu0 0.0
  %628 = vmatpush1.msra.mxu0 0.0
  %629 = vmatprep.subr.mxu0 0.0
  %630 = vmatpush1.msra.mxu0 0.0
  %631 = vmatprep.subr.mxu0 0.0
  %632 = vmatpush1.msra.mxu0 0.0
  %633 = vmatprep.subr.mxu0 0.0
  %634 = vmatpush1.msra.mxu0 0.0
  %635 = vmatprep.subr.mxu0 0.0
  %636 = vmatpush1.msra.mxu0 0.0
  %637 = vmatprep.subr.mxu0 0.0
  %638 = vmatpush1.msra.mxu0 0.0
  %639 = vmatprep.subr.mxu0 0.0
  %640 = vmatpush1.msra.mxu0 0.0
  %641 = vmatprep.subr.mxu0 0.0
  %642 = vmatpush1.msra.mxu0 0.0
  %643 = vmatprep.subr.mxu0 0.0
  %644 = vmatpush1.msra.mxu0 0.0
  %645 = vmatprep.subr.mxu0 0.0
  %646 = vmatpush1.msra.mxu0 0.0
  %647 = vmatprep.subr.mxu0 0.0
  %648 = vmatpush1.msra.mxu0 0.0
  %649 = vmatprep.subr.mxu0 0.0
  %650 = vmatpush1.msra.mxu0 0.0
  %651 = vmatprep.subr.mxu0 0.0
  %652 = vmatpush1.msra.mxu0 0.0
  %653 = vmatprep.subr.mxu0 0.0
  %654 = vmatpush1.msra.mxu0 0.0
  %655 = vmatprep.subr.mxu0 0.0
  %656 = vmatpush1.msra.mxu0 0.0
  %657 = vmatprep.subr.mxu0 0.0
  %658 = vmatpush1.msra.mxu0 0.0
  %659 = vmatprep.subr.mxu0 0.0
  %660 = vmatpush1.msra.mxu0 0.0
  %661 = vmatprep.mubr.f32.mxu0 0.0
  %662 = vmatmul.mubr.f32.gmra.mrb[0].mxu0 %v595
  %v663 = vpop.f32.mrb[0].mxu0
  %v664 = vadd.f32 0.0, %v663
  %v665 = vpop.f32.mrb[0].mxu0
  %666 = vdwg.mxu0
  %v668 = vsel %vm93, %v34, 0
  %670 = vmatprep.subr.mxu0 0.0
  %671 = vmatpush1.msra.mxu0 %v29
  %672 = vmatprep.subr.mxu0 0.0
  %673 = vmatpush1.msra.mxu0 0.0
  %674 = vmatprep.subr.mxu0 0.0
  %675 = vmatpush1.msra.mxu0 0.0
  %676 = vmatprep.subr.mxu0 0.0
  %677 = vmatpush1.msra.mxu0 0.0
  %678 = vmatprep.subr.mxu0 0.0
  %679 = vmatpush1.msra.mxu0 0.0
  %680 = vmatprep.subr.mxu0 0.0
  %681 = vmatpush1.msra.mxu0 0.0
  %682 = vmatprep.subr.mxu0 0.0
  %683 = vmatpush1.msra.mxu0 0.0
  %684 = vmatprep.subr.mxu0 0.0
  %685 = vmatpush1.msra.mxu0 0.0
  %686 = vmatprep.subr.mxu0 0.0
  %687 = vmatpush1.msra.mxu0 0.0
  %688 = vmatprep.subr.mxu0 0.0
  %689 = vmatpush1.msra.mxu0 0.0
  %690 = vmatprep.subr.mxu0 0.0
  %691 = vmatpush1.msra.mxu0 0.0
  %692 = vmatprep.subr.mxu0 0.0
  %693 = vmatpush1.msra.mxu0 0.0
  %694 = vmatprep.subr.mxu0 0.0
  %695 = vmatpush1.msra.mxu0 0.0
  %696 = vmatprep.subr.mxu0 0.0
  %697 = vmatpush1.msra.mxu0 0.0
  %698 = vmatprep.subr.mxu0 0.0
  %699 = vmatpush1.msra.mxu0 0.0
  %700 = vmatprep.subr.mxu0 0.0
  %701 = vmatpush1.msra.mxu0 0.0
  %702 = vmatprep.subr.mxu0 0.0
  %703 = vmatpush1.msra.mxu0 0.0
  %704 = vmatprep.subr.mxu0 0.0
  %705 = vmatpush1.msra.mxu0 0.0
  %706 = vmatprep.subr.mxu0 0.0
  %707 = vmatpush1.msra.mxu0 0.0
  %708 = vmatprep.subr.mxu0 0.0
  %709 = vmatpush1.msra.mxu0 0.0
  %710 = vmatprep.subr.mxu0 0.0
  %711 = vmatpush1.msra.mxu0 0.0
  %712 = vmatprep.subr.mxu0 0.0
  %713 = vmatpush1.msra.mxu0 0.0
  %714 = vmatprep.subr.mxu0 0.0
  %715 = vmatpush1.msra.mxu0 0.0
  %716 = vmatprep.subr.mxu0 0.0
  %717 = vmatpush1.msra.mxu0 0.0
  %718 = vmatprep.subr.mxu0 0.0
  %719 = vmatpush1.msra.mxu0 0.0
  %720 = vmatprep.subr.mxu0 0.0
  %721 = vmatpush1.msra.mxu0 0.0
  %722 = vmatprep.subr.mxu0 0.0
  %723 = vmatpush1.msra.mxu0 0.0
  %724 = vmatprep.subr.mxu0 0.0
  %725 = vmatpush1.msra.mxu0 0.0
  %726 = vmatprep.subr.mxu0 0.0
  %727 = vmatpush1.msra.mxu0 0.0
  %728 = vmatprep.subr.mxu0 0.0
  %729 = vmatpush1.msra.mxu0 0.0
  %730 = vmatprep.subr.mxu0 0.0
  %731 = vmatpush1.msra.mxu0 0.0
  %732 = vmatprep.subr.mxu0 0.0
  %733 = vmatpush1.msra.mxu0 0.0
  %734 = vmatprep.mubr.f32.mxu0 0.0
  %735 = vmatmul.mubr.f32.gmra.mrb[0].mxu0 %v668
  %v736 = vpop.f32.mrb[0].mxu0
  %v737 = vadd.f32 %v664, %v736
  %v738 = vpop.f32.mrb[0].mxu0
  %739 = vdwg.mxu0
  %741 = vset.pattern.permute.xlu0 0
  %742 = vperm.xlu0 %741, %v41
  %v743 = vpop.permute.xlu0 %742
  %v745 = vadd.f32 %v737, %v743
  %v746 = vand.u32 2147483647, %v745
  %vm747 = vcmp.le.f32.partialorder %v746, 0.7853982
  %vm748 = vcmp.lt.s32.totalorder %v745, 0
  %v749 = vand.u32 %v745, 2139095040
  %v750 = vshrl.u32 %v749, 23
  %v751 = vsub.s32 %v750, 127
  %v752 = vand.u32 2147483647, %v745
  %v753 = vand.u32 %v752, 8388607
  %v754 = vor.u32 %v753, 8388608
  %v755 = vsub.s32 0, %v754
  %v756 = vadd.s32 %v751, 1
  %vm757 = vcmp.gt.s32.totalorder %v756, 0
  %v758 = vsel %vm757, %v756, 0
  %v759 = vshrl.u32 %v758, 5
  %v760 = vand.u32 %v758, 31
  %v761 = vsub.s32 32, %v760
  %v762 = vshrl.u32 683565275, %v761
  %v763 = vshll.u32 683565275, %v760
  %v764 = vshrl.u32 2475754826, %v761
  %v765 = vor.u32 %v763, %v764
  %v766 = vshll.u32 2475754826, %v760
  %v767 = vshrl.u32 2131351028, %v761
  %v768 = vor.u32 %v766, %v767
  %v769 = vshll.u32 2131351028, %v760
  %v770 = vshrl.u32 2102212464, %v761
  %v771 = vor.u32 %v769, %v770
  %v772 = vshll.u32 2102212464, %v760
  %v773 = vshrl.u32 920167782, %v761
  %v774 = vor.u32 %v772, %v773
  %v775 = vshll.u32 920167782, %v760
  %v776 = vshrl.u32 1326507024, %v761
  %v777 = vor.u32 %v775, %v776
  %vm778 = vcmp.lt.s32.totalorder %v759, 1
  %vm779 = vcmp.lt.s32.totalorder %v759, 2
  %vm780 = vcmp.lt.s32.totalorder %v759, 3
  %vm781 = vcmp.lt.s32.totalorder %v759, 4
  %v782 = vsel %vm778, %v762, %v765
  %v783 = vsel %vm781, %v771, 2102212464
  %v784 = vsel %vm780, %v768, %v783
  %v785 = vsel %vm779, %v782, %v784
  %v786 = vsel %vm778, %v765, %v768
  %v787 = vsel %vm781, %v774, 920167782
  %v788 = vsel %vm780, %v771, %v787
  %v789 = vsel %vm779, %v786, %v788
  %v790 = vsel %vm778, %v768, %v771
  %v791 = vsel %vm781, %v777, 1326507024
  %v792 = vsel %vm780, %v774, %v791
  %v793 = vsel %vm779, %v790, %v792
  %v794 = vshll.u32 %v754, 8
  %v795 = vmul.u32.u64.compose %v794, %v793
  %v796 = vextract.low.u32 %v795
  %v797 = vextract.high.u32 %v795
  %v798 = vmul.u32.u64.compose %v794, %v789
  %v799 = vextract.low.u32 %v798
  %v800 = vextract.high.u32 %v798
  %v801 = vmul.u32 %v794, %v785
  %v802 = vadd.s32 %v797, %v799
  %vm803 = vc.u32 %v797, %v799
  %v804 = vadd.s32 %v800, 1
  %v805 = vsel %vm803, %v804, %v800
  %v806 = vadd.s32 %v801, %v805
  %v807 = vadd.s32 %v806, 536870912
  %v808 = vshrl.u32 %v807, 30
  %v809 = vshll.u32 %v808, 30
  %v810 = vsub.s32 %v806, %v809
  %vm811 = vcmp.lt.s32.totalorder %v810, 0
  %v812 = vsub.s32 0, %v810
  %v813 = vsel %vm811, %v812, %v810
  %v814 = vclz %v813
  %v815 = vsub.s32 %v814, 2
  %vm816 = vcmp.gt.s32.totalorder 0, %v815
  %v817 = vsel %vm816, 0, %v815
  %v818 = vsub.s32 32, %v817
  %v819 = vshll.u32 %v810, %v817
  %v820 = vshrl.u32 %v802, %v818
  %v821 = vor.u32 %v819, %v820
  %v822 = vsub.s32 4294967266, %v817
  %v823 = vadd.s32 %v822, 127
  %v824 = vshll.u32 %v823, 23
  %v825 = vor.u32 4788187, %v824
  %v826 = vand.u32 2147483647, %v825
  %v828 = vcvt.s32.f32 %v821
  %v829 = vmul.f32 %v828, %v826
  %v830 = vxor.u32 %v829, 2147483648
  %v831 = vsel %vm748, %v830, %v829
  %v832 = vsub.s32 4, %v808
  %v833 = vsel %vm748, %v832, %v808
  %v834 = vsel %vm747, %v745, %v831
  %v835 = vsel %vm747, 0, %v833
  %v836 = vcosq.f32.pop %v834
  %v837 = vsinq.f32.pop %v834
  %vm838 = vweird.f32 %v745
  %v839 = vand.u32 %v835, 3
  %vm840 = vcmp.lt.s32.totalorder %v839, 2
  %vm841 = vcmp.eq.s32.totalorder %v839, 0
  %v842 = vxor.u32 %v837, 2147483648
  %v843 = vsel %vm841, %v836, %v842
  %vm844 = vcmp.eq.s32.totalorder %v839, 2
  %v845 = vxor.u32 %v836, 2147483648
  %v846 = vsel %vm844, %v845, %v837
  %v847 = vsel %vm840, %v843, %v846
  %v848 = vsel %vm838, nan, %v847
  %v849 = vmul.f32 %v593, %v848
  %v850 = vand.u32 2147483647, %v745
  %vm851 = vcmp.le.f32.partialorder %v850, 0.7853982
  %vm852 = vcmp.lt.s32.totalorder %v745, 0
  %v853 = vand.u32 %v745, 2139095040
  %v854 = vshrl.u32 %v853, 23
  %v855 = vsub.s32 %v854, 127
  %v856 = vand.u32 2147483647, %v745
  %v857 = vand.u32 %v856, 8388607
  %v858 = vor.u32 %v857, 8388608
  %v859 = vsub.s32 0, %v858
  %v860 = vadd.s32 %v855, 1
  %vm861 = vcmp.gt.s32.totalorder %v860, 0
  %v862 = vsel %vm861, %v860, 0
  %v863 = vshrl.u32 %v862, 5
  %v864 = vand.u32 %v862, 31
  %v865 = vsub.s32 32, %v864
  %v866 = vshrl.u32 683565275, %v865
  %v867 = vshll.u32 683565275, %v864
  %v868 = vshrl.u32 2475754826, %v865
  %v869 = vor.u32 %v867, %v868
  %v870 = vshll.u32 2475754826, %v864
  %v871 = vshrl.u32 2131351028, %v865
  %v872 = vor.u32 %v870, %v871
  %v873 = vshll.u32 2131351028, %v864
  %v874 = vshrl.u32 2102212464, %v865
  %v875 = vor.u32 %v873, %v874
  %v876 = vshll.u32 2102212464, %v864
  %v877 = vshrl.u32 920167782, %v865
  %v878 = vor.u32 %v876, %v877
  %v879 = vshll.u32 920167782, %v864
  %v880 = vshrl.u32 1326507024, %v865
  %v881 = vor.u32 %v879, %v880
  %vm882 = vcmp.lt.s32.totalorder %v863, 1
  %vm883 = vcmp.lt.s32.totalorder %v863, 2
  %vm884 = vcmp.lt.s32.totalorder %v863, 3
  %vm885 = vcmp.lt.s32.totalorder %v863, 4
  %v886 = vsel %vm882, %v866, %v869
  %v887 = vsel %vm885, %v875, 2102212464
  %v888 = vsel %vm884, %v872, %v887
  %v889 = vsel %vm883, %v886, %v888
  %v890 = vsel %vm882, %v869, %v872
  %v891 = vsel %vm885, %v878, 920167782
  %v892 = vsel %vm884, %v875, %v891
  %v893 = vsel %vm883, %v890, %v892
  %v894 = vsel %vm882, %v872, %v875
  %v895 = vsel %vm885, %v881, 1326507024
  %v896 = vsel %vm884, %v878, %v895
  %v897 = vsel %vm883, %v894, %v896
  %v898 = vshll.u32 %v858, 8
  %v899 = vmul.u32.u64.compose %v898, %v897
  %v900 = vextract.low.u32 %v899
  %v901 = vextract.high.u32 %v899
  %v902 = vmul.u32.u64.compose %v898, %v893
  %v903 = vextract.low.u32 %v902
  %v904 = vextract.high.u32 %v902
  %v905 = vmul.u32 %v898, %v889
  %v906 = vadd.s32 %v901, %v903
  %vm907 = vc.u32 %v901, %v903
  %v908 = vadd.s32 %v904, 1
  %v909 = vsel %vm907, %v908, %v904
  %v910 = vadd.s32 %v905, %v909
  %v911 = vadd.s32 %v910, 536870912
  %v912 = vshrl.u32 %v911, 30
  %v913 = vshll.u32 %v912, 30
  %v914 = vsub.s32 %v910, %v913
  %vm915 = vcmp.lt.s32.totalorder %v914, 0
  %v916 = vsub.s32 0, %v914
  %v917 = vsel %vm915, %v916, %v914
  %v918 = vclz %v917
  %v919 = vsub.s32 %v918, 2
  %vm920 = vcmp.gt.s32.totalorder 0, %v919
  %v921 = vsel %vm920, 0, %v919
  %v922 = vsub.s32 32, %v921
  %v923 = vshll.u32 %v914, %v921
  %v924 = vshrl.u32 %v906, %v922
  %v925 = vor.u32 %v923, %v924
  %v926 = vsub.s32 4294967266, %v921
  %v927 = vadd.s32 %v926, 127
  %v928 = vshll.u32 %v927, 23
  %v929 = vor.u32 4788187, %v928
  %v930 = vand.u32 2147483647, %v929
  %v932 = vcvt.s32.f32 %v925
  %v933 = vmul.f32 %v932, %v930
  %v934 = vxor.u32 %v933, 2147483648
  %v935 = vsel %vm852, %v934, %v933
  %v936 = vsub.s32 4, %v912
  %v937 = vsel %vm852, %v936, %v912
  %v938 = vsel %vm851, %v745, %v935
  %v939 = vsel %vm851, 0, %v937
  %v940 = vcosq.f32.pop %v938
  %v941 = vsinq.f32.pop %v938
  %vm942 = vweird.f32 %v745
  %v943 = vadd.s32 %v939, 3
  %v944 = vand.u32 %v943, 3
  %vm945 = vcmp.lt.s32.totalorder %v944, 2
  %vm946 = vcmp.eq.s32.totalorder %v944, 0
  %v947 = vxor.u32 %v941, 2147483648
  %v948 = vsel %vm946, %v940, %v947
  %vm949 = vcmp.eq.s32.totalorder %v944, 2
  %v950 = vxor.u32 %v940, 2147483648
  %v951 = vsel %vm949, %v950, %v941
  %v952 = vsel %vm945, %v948, %v951
  %v953 = vsel %vm942, nan, %v952
  %v954 = vmul.f32 %v593, %v953
  %v955 = vld [vmem:[%s6] sm:$0xff]
  %v956 = vld [vmem:[%s6 + $0x8] sm:$0xff]
  %v957 = vld [vmem:[%s6 + $0x10] sm:$0xff]
  %v958 = vld [vmem:[%s6 + $0x18] sm:$0xff]
  %v959 = vld [vmem:[%s6 + $0x20] sm:$0xff]
  %v960 = vld [vmem:[%s6 + $0x28] sm:$0xff]
  %v961 = vld [vmem:[%s6 + $0x30] sm:$0xff]
  %v962 = vld [vmem:[%s6 + $0x38] sm:$0xff]
  %v963 = vld [vmem:[%s6 + $0x40] sm:$0xff]
  %v964 = vld [vmem:[%s6 + $0x48] sm:$0xff]
  %v965 = vld [vmem:[%s6 + $0x50] sm:$0xff]
  %v966 = vld [vmem:[%s6 + $0x58] sm:$0xff]
  %v967 = vld [vmem:[%s6 + $0x60] sm:$0xff]
  %v968 = vld [vmem:[%s6 + $0x68] sm:$0xff]
  %v969 = vld [vmem:[%s6 + $0x70] sm:$0xff]
  %v970 = vld [vmem:[%s6 + $0x78] sm:$0xff]
  %v971 = vld [vmem:[%s6 + $0x80] sm:$0xff]
  %v972 = vld [vmem:[%s6 + $0x88] sm:$0xff]
  %v973 = vld [vmem:[%s6 + $0x90] sm:$0xff]
  %v974 = vld [vmem:[%s6 + $0x98] sm:$0xff]
  %v975 = vld [vmem:[%s6 + $0xa0] sm:$0xff]
  %v976 = vld [vmem:[%s6 + $0xa8] sm:$0xff]
  %v977 = vld [vmem:[%s6 + $0xb0] sm:$0xff]
  %v978 = vld [vmem:[%s6 + $0xb8] sm:$0xff]
  %v979 = vld [vmem:[%s6 + $0xc0] sm:$0xff]
  %v980 = vld [vmem:[%s6 + $0xc8] sm:$0xff]
  %v981 = vld [vmem:[%s6 + $0xd0] sm:$0xff]
  %v982 = vld [vmem:[%s6 + $0xd8] sm:$0xff]
  %v983 = vld [vmem:[%s6 + $0xe0] sm:$0xff]
  %v984 = vld [vmem:[%s6 + $0xe8] sm:$0xff]
  %v985 = vld [vmem:[%s6 + $0xf0] sm:$0xff]
  %v986 = vld [vmem:[%s6 + $0xf8] sm:$0xff]
  %987 = vmatprep.subr.mxu0 0.0
  %988 = vmatpush1.msra.mxu0 %v955
  %989 = vmatprep.subr.mxu0 0.0
  %990 = vmatpush1.msra.mxu0 %v956
  %991 = vmatprep.subr.mxu0 0.0
  %992 = vmatpush1.msra.mxu0 %v957
  %993 = vmatprep.subr.mxu0 0.0
  %994 = vmatpush1.msra.mxu0 %v958
  %995 = vmatprep.subr.mxu0 0.0
  %996 = vmatpush1.msra.mxu0 %v959
  %997 = vmatprep.subr.mxu0 0.0
  %998 = vmatpush1.msra.mxu0 %v960
  %999 = vmatprep.subr.mxu0 0.0
  %1000 = vmatpush1.msra.mxu0 %v961
  %1001 = vmatprep.subr.mxu0 0.0
  %1002 = vmatpush1.msra.mxu0 %v962
  %1003 = vmatprep.subr.mxu0 0.0
  %1004 = vmatpush1.msra.mxu0 %v963
  %1005 = vmatprep.subr.mxu0 0.0
  %1006 = vmatpush1.msra.mxu0 %v964
  %1007 = vmatprep.subr.mxu0 0.0
  %1008 = vmatpush1.msra.mxu0 %v965
  %1009 = vmatprep.subr.mxu0 0.0
  %1010 = vmatpush1.msra.mxu0 %v966
  %1011 = vmatprep.subr.mxu0 0.0
  %1012 = vmatpush1.msra.mxu0 %v967
  %1013 = vmatprep.subr.mxu0 0.0
  %1014 = vmatpush1.msra.mxu0 %v968
  %1015 = vmatprep.subr.mxu0 0.0
  %1016 = vmatpush1.msra.mxu0 %v969
  %1017 = vmatprep.subr.mxu0 0.0
  %1018 = vmatpush1.msra.mxu0 %v970
  %1019 = vmatprep.subr.mxu0 0.0
  %1020 = vmatpush1.msra.mxu0 %v971
  %1021 = vmatprep.subr.mxu0 0.0
  %1022 = vmatpush1.msra.mxu0 %v972
  %1023 = vmatprep.subr.mxu0 0.0
  %1024 = vmatpush1.msra.mxu0 %v973
  %1025 = vmatprep.subr.mxu0 0.0
  %1026 = vmatpush1.msra.mxu0 %v974
  %1027 = vmatprep.subr.mxu0 0.0
  %1028 = vmatpush1.msra.mxu0 %v975
  %1029 = vmatprep.subr.mxu0 0.0
  %1030 = vmatpush1.msra.mxu0 %v976
  %1031 = vmatprep.subr.mxu0 0.0
  %1032 = vmatpush1.msra.mxu0 %v977
  %1033 = vmatprep.subr.mxu0 0.0
  %1034 = vmatpush1.msra.mxu0 %v978
  %1035 = vmatprep.subr.mxu0 0.0
  %1036 = vmatpush1.msra.mxu0 %v979
  %1037 = vmatprep.subr.mxu0 0.0
  %1038 = vmatpush1.msra.mxu0 %v980
  %1039 = vmatprep.subr.mxu0 0.0
  %1040 = vmatpush1.msra.mxu0 %v981
  %1041 = vmatprep.subr.mxu0 0.0
  %1042 = vmatpush1.msra.mxu0 %v982
  %1043 = vmatprep.subr.mxu0 0.0
  %1044 = vmatpush1.msra.mxu0 %v983
  %1045 = vmatprep.subr.mxu0 0.0
  %1046 = vmatpush1.msra.mxu0 %v984
  %1047 = vmatprep.subr.mxu0 0.0
  %1048 = vmatpush1.msra.mxu0 %v985
  %1049 = vmatprep.subr.mxu0 0.0
  %1050 = vmatpush1.msra.mxu0 %v986
  %1051 = vmatprep.mubr.f32.mxu0 %v954
  %1052 = vmatmul.mubr.f32.gmra.mrb[0].mxu0 %v849
  %v1053 = vpop.f32.mrb[0].mxu0
  %v1054 = vadd.f32 0.0, %v1053
  %v1055 = vpop.f32.mrb[0].mxu0
  %1056 = vdwg.mxu0
  %v1057 = vld [vmem:[%s4] sm:$0xff]
  %1059 = vrot.lane.b32.xlu0 %v1057, 120
  %v1060 = vpop.permute.xlu0 %1059
  %v1061 = vsel %vm93, %v1060, 0
  %1063 = vmatprep.subr.mxu0 0.0
  %1064 = vmatpush1.msra.mxu0 %v849
  %1065 = vmatprep.subr.mxu0 0.0
  %1066 = vmatpush1.msra.mxu0 0.0
  %1067 = vmatprep.subr.mxu0 0.0
  %1068 = vmatpush1.msra.mxu0 0.0
  %1069 = vmatprep.subr.mxu0 0.0
  %1070 = vmatpush1.msra.mxu0 0.0
  %1071 = vmatprep.subr.mxu0 0.0
  %1072 = vmatpush1.msra.mxu0 0.0
  %1073 = vmatprep.subr.mxu0 0.0
  %1074 = vmatpush1.msra.mxu0 0.0
  %1075 = vmatprep.subr.mxu0 0.0
  %1076 = vmatpush1.msra.mxu0 0.0
  %1077 = vmatprep.subr.mxu0 0.0
  %1078 = vmatpush1.msra.mxu0 0.0
  %1079 = vmatprep.subr.mxu0 0.0
  %1080 = vmatpush1.msra.mxu0 0.0
  %1081 = vmatprep.subr.mxu0 0.0
  %1082 = vmatpush1.msra.mxu0 0.0
  %1083 = vmatprep.subr.mxu0 0.0
  %1084 = vmatpush1.msra.mxu0 0.0
  %1085 = vmatprep.subr.mxu0 0.0
  %1086 = vmatpush1.msra.mxu0 0.0
  %1087 = vmatprep.subr.mxu0 0.0
  %1088 = vmatpush1.msra.mxu0 0.0
  %1089 = vmatprep.subr.mxu0 0.0
  %1090 = vmatpush1.msra.mxu0 0.0
  %1091 = vmatprep.subr.mxu0 0.0
  %1092 = vmatpush1.msra.mxu0 0.0
  %1093 = vmatprep.subr.mxu0 0.0
  %1094 = vmatpush1.msra.mxu0 0.0
  %1095 = vmatprep.subr.mxu0 0.0
  %1096 = vmatpush1.msra.mxu0 0.0
  %1097 = vmatprep.subr.mxu0 0.0
  %1098 = vmatpush1.msra.mxu0 0.0
  %1099 = vmatprep.subr.mxu0 0.0
  %1100 = vmatpush1.msra.mxu0 0.0
  %1101 = vmatprep.subr.mxu0 0.0
  %1102 = vmatpush1.msra.mxu0 0.0
  %1103 = vmatprep.subr.mxu0 0.0
  %1104 = vmatpush1.msra.mxu0 0.0
  %1105 = vmatprep.subr.mxu0 0.0
  %1106 = vmatpush1.msra.mxu0 0.0
  %1107 = vmatprep.subr.mxu0 0.0
  %1108 = vmatpush1.msra.mxu0 0.0
  %1109 = vmatprep.subr.mxu0 0.0
  %1110 = vmatpush1.msra.mxu0 0.0
  %1111 = vmatprep.subr.mxu0 0.0
  %1112 = vmatpush1.msra.mxu0 0.0
  %1113 = vmatprep.subr.mxu0 0.0
  %1114 = vmatpush1.msra.mxu0 0.0
  %1115 = vmatprep.subr.mxu0 0.0
  %1116 = vmatpush1.msra.mxu0 0.0
  %1117 = vmatprep.subr.mxu0 0.0
  %1118 = vmatpush1.msra.mxu0 0.0
  %1119 = vmatprep.subr.mxu0 0.0
  %1120 = vmatpush1.msra.mxu0 0.0
  %1121 = vmatprep.subr.mxu0 0.0
  %1122 = vmatpush1.msra.mxu0 0.0
  %1123 = vmatprep.subr.mxu0 0.0
  %1124 = vmatpush1.msra.mxu0 0.0
  %1125 = vmatprep.subr.mxu0 0.0
  %1126 = vmatpush1.msra.mxu0 0.0
  %1127 = vmatprep.mubr.f32.mxu0 0.0
  %1128 = vmatmul.mubr.f32.gmra.mrb[0].mxu0 %v1061
  %v1129 = vpop.f32.mrb[0].mxu0
  %v1130 = vadd.f32 0.0, %v1129
  %v1131 = vpop.f32.mrb[0].mxu0
  %1132 = vdwg.mxu0
  %v1133 = vsel %vm93, %v1057, 0
  %1135 = vmatprep.subr.mxu0 0.0
  %1136 = vmatpush1.msra.mxu0 %v1054
  %1137 = vmatprep.subr.mxu0 0.0
  %1138 = vmatpush1.msra.mxu0 0.0
  %1139 = vmatprep.subr.mxu0 0.0
  %1140 = vmatpush1.msra.mxu0 0.0
  %1141 = vmatprep.subr.mxu0 0.0
  %1142 = vmatpush1.msra.mxu0 0.0
  %1143 = vmatprep.subr.mxu0 0.0
  %1144 = vmatpush1.msra.mxu0 0.0
  %1145 = vmatprep.subr.mxu0 0.0
  %1146 = vmatpush1.msra.mxu0 0.0
  %1147 = vmatprep.subr.mxu0 0.0
  %1148 = vmatpush1.msra.mxu0 0.0
  %1149 = vmatprep.subr.mxu0 0.0
  %1150 = vmatpush1.msra.mxu0 0.0
  %1151 = vmatprep.subr.mxu0 0.0
  %1152 = vmatpush1.msra.mxu0 0.0
  %1153 = vmatprep.subr.mxu0 0.0
  %1154 = vmatpush1.msra.mxu0 0.0
  %1155 = vmatprep.subr.mxu0 0.0
  %1156 = vmatpush1.msra.mxu0 0.0
  %1157 = vmatprep.subr.mxu0 0.0
  %1158 = vmatpush1.msra.mxu0 0.0
  %1159 = vmatprep.subr.mxu0 0.0
  %1160 = vmatpush1.msra.mxu0 0.0
  %1161 = vmatprep.subr.mxu0 0.0
  %1162 = vmatpush1.msra.mxu0 0.0
  %1163 = vmatprep.subr.mxu0 0.0
  %1164 = vmatpush1.msra.mxu0 0.0
  %1165 = vmatprep.subr.mxu0 0.0
  %1166 = vmatpush1.msra.mxu0 0.0
  %1167 = vmatprep.subr.mxu0 0.0
  %1168 = vmatpush1.msra.mxu0 0.0
  %1169 = vmatprep.subr.mxu0 0.0
  %1170 = vmatpush1.msra.mxu0 0.0
  %1171 = vmatprep.subr.mxu0 0.0
  %1172 = vmatpush1.msra.mxu0 0.0
  %1173 = vmatprep.subr.mxu0 0.0
  %1174 = vmatpush1.msra.mxu0 0.0
  %1175 = vmatprep.subr.mxu0 0.0
  %1176 = vmatpush1.msra.mxu0 0.0
  %1177 = vmatprep.subr.mxu0 0.0
  %1178 = vmatpush1.msra.mxu0 0.0
  %1179 = vmatprep.subr.mxu0 0.0
  %1180 = vmatpush1.msra.mxu0 0.0
  %1181 = vmatprep.subr.mxu0 0.0
  %1182 = vmatpush1.msra.mxu0 0.0
  %1183 = vmatprep.subr.mxu0 0.0
  %1184 = vmatpush1.msra.mxu0 0.0
  %1185 = vmatprep.subr.mxu0 0.0
  %1186 = vmatpush1.msra.mxu0 0.0
  %1187 = vmatprep.subr.mxu0 0.0
  %1188 = vmatpush1.msra.mxu0 0.0
  %1189 = vmatprep.subr.mxu0 0.0
  %1190 = vmatpush1.msra.mxu0 0.0
  %1191 = vmatprep.subr.mxu0 0.0
  %1192 = vmatpush1.msra.mxu0 0.0
  %1193 = vmatprep.subr.mxu0 0.0
  %1194 = vmatpush1.msra.mxu0 0.0
  %1195 = vmatprep.subr.mxu0 0.0
  %1196 = vmatpush1.msra.mxu0 0.0
  %1197 = vmatprep.subr.mxu0 0.0
  %1198 = vmatpush1.msra.mxu0 0.0
  %1199 = vmatprep.mubr.f32.mxu0 0.0
  %1200 = vmatmul.mubr.f32.gmra.mrb[0].mxu0 %v1133
  %v1201 = vpop.f32.mrb[0].mxu0
  %v1202 = vadd.f32 %v1130, %v1201
  %v1203 = vpop.f32.mrb[0].mxu0
  %1204 = vdwg.mxu0
  %1206 = vset.pattern.permute.xlu0 0
  %1207 = vperm.xlu0 %1206, %v42
  %v1208 = vpop.permute.xlu0 %1207
  %v1210 = vadd.f32 %v1202, %v1208
  %1211 = vst [vmem:[%s7] sm:$0xff] %v1210
  %1212 = vmatprep.subr.mxu0 0.0
  %1213 = vmatpush1.msra.mxu0 %v954
  %1214 = vmatprep.subr.mxu0 0.0
  %1215 = vmatpush1.msra.mxu0 0.0
  %1216 = vmatprep.subr.mxu0 0.0
  %1217 = vmatpush1.msra.mxu0 0.0
  %1218 = vmatprep.subr.mxu0 0.0
  %1219 = vmatpush1.msra.mxu0 0.0
  %1220 = vmatprep.subr.mxu0 0.0
  %1221 = vmatpush1.msra.mxu0 0.0
  %1222 = vmatprep.subr.mxu0 0.0
  %1223 = vmatpush1.msra.mxu0 0.0
  %1224 = vmatprep.subr.mxu0 0.0
  %1225 = vmatpush1.msra.mxu0 0.0
  %1226 = vmatprep.subr.mxu0 0.0
  %1227 = vmatpush1.msra.mxu0 0.0
  %1228 = vmatprep.subr.mxu0 0.0
  %1229 = vmatpush1.msra.mxu0 0.0
  %1230 = vmatprep.subr.mxu0 0.0
  %1231 = vmatpush1.msra.mxu0 0.0
  %1232 = vmatprep.subr.mxu0 0.0
  %1233 = vmatpush1.msra.mxu0 0.0
  %1234 = vmatprep.subr.mxu0 0.0
  %1235 = vmatpush1.msra.mxu0 0.0
  %1236 = vmatprep.subr.mxu0 0.0
  %1237 = vmatpush1.msra.mxu0 0.0
  %1238 = vmatprep.subr.mxu0 0.0
  %1239 = vmatpush1.msra.mxu0 0.0
  %1240 = vmatprep.subr.mxu0 0.0
  %1241 = vmatpush1.msra.mxu0 0.0
  %1242 = vmatprep.subr.mxu0 0.0
  %1243 = vmatpush1.msra.mxu0 0.0
  %1244 = vmatprep.subr.mxu0 0.0
  %1245 = vmatpush1.msra.mxu0 0.0
  %1246 = vmatprep.subr.mxu0 0.0
  %1247 = vmatpush1.msra.mxu0 0.0
  %1248 = vmatprep.subr.mxu0 0.0
  %1249 = vmatpush1.msra.mxu0 0.0
  %1250 = vmatprep.subr.mxu0 0.0
  %1251 = vmatpush1.msra.mxu0 0.0
  %1252 = vmatprep.subr.mxu0 0.0
  %1253 = vmatpush1.msra.mxu0 0.0
  %1254 = vmatprep.subr.mxu0 0.0
  %1255 = vmatpush1.msra.mxu0 0.0
  %1256 = vmatprep.subr.mxu0 0.0
  %1257 = vmatpush1.msra.mxu0 0.0
  %1258 = vmatprep.subr.mxu0 0.0
  %1259 = vmatpush1.msra.mxu0 0.0
  %1260 = vmatprep.subr.mxu0 0.0
  %1261 = vmatpush1.msra.mxu0 0.0
  %1262 = vmatprep.subr.mxu0 0.0
  %1263 = vmatpush1.msra.mxu0 0.0
  %1264 = vmatprep.subr.mxu0 0.0
  %1265 = vmatpush1.msra.mxu0 0.0
  %1266 = vmatprep.subr.mxu0 0.0
  %1267 = vmatpush1.msra.mxu0 0.0
  %1268 = vmatprep.subr.mxu0 0.0
  %1269 = vmatpush1.msra.mxu0 0.0
  %1270 = vmatprep.subr.mxu0 0.0
  %1271 = vmatpush1.msra.mxu0 0.0
  %1272 = vmatprep.subr.mxu0 0.0
  %1273 = vmatpush1.msra.mxu0 0.0
  %1274 = vmatprep.subr.mxu0 0.0
  %1275 = vmatpush1.msra.mxu0 0.0
  %1276 = vmatprep.mubr.f32.mxu0 0.0
  %1277 = vmatmul.mubr.f32.gmra.mrb[0].mxu0 %v1061
  %v1278 = vpop.f32.mrb[0].mxu0
  %v1279 = vadd.f32 0.0, %v1278
  %v1280 = vpop.f32.mrb[0].mxu0
  %1281 = vdwg.mxu0
  %1282 = vst [vmem:[%s7 + $0x8] sm:$0xff] %v1279
  // Predicated region
  $region30: #{final_adjust.1} parent=0 // pred_check
    _
  $region31: #{final_adjust.1} parent=0 // pred_check_branch
    %1284 = sbr.rel (0) target = $region33
  $region32: #{final_adjust.1} parent=0 // pred_region
    _
  $region33: #{final_adjust.1} parent=0 // pred_fallthru
    _
  // Predicated region
  $region34: #{final_adjust.1} parent=0 // pred_check
    _
  $region35: #{final_adjust.1} parent=0 // pred_check_branch
    %1286 = sbr.rel (0) target = $region37
  $region36: #{final_adjust.1} parent=0 // pred_region
    _
  $region37: #{final_adjust.1} parent=0 // pred_fallthru
    _

</llo_original>
